<compile_context>
chip_gen: v7x
topology: tpu7x:2x2x1
jax: 0.10.0
libtpu: 0.0.40
codegen_flags: <defaults>
</compile_context>

<pallas_src>
import functools

import jax
import jax.numpy as jnp
from jax.experimental import pallas as pl
from jax.experimental.pallas import tpu as pltpu

LN_EPS = 1e-5
_SQRT_HALF = 0.7071067811865476
_SQRT_2_OVER_PI = 0.7978845608028654


def _round_up(x, m):
    return (x + m - 1) // m * m


def _cdiv(a, b):
    return -(-a // b)


def _vmem_capacity_bytes():
    """Physical VMEM per TensorCore for the current generation (with fallback)."""
    try:
        info = pltpu.get_tpu_info()
        cap = getattr(info, "vmem_capacity_bytes", None)
        if cap:
            return int(cap)
    except Exception:
        pass
    return 64 * 1024 * 1024  # conservative: v7x per-TC size


def mlp_block_kernel(c_actual, tile_f, exact_gelu,
                     x_ref,
                     g1_ref, be1_ref, w11_ref, b11_ref, w12_ref, b12_ref,
                     g2_ref, be2_ref, w21_ref, b21_ref, w22_ref, b22_ref,
                     o_ref):
    x = x_ref[...].astype(jnp.float32)
    c_pad = x.shape[-1]
    inv_c = jnp.float32(1.0 / c_actual)

    if c_pad != c_actual:
        # (1, Cp) mask, broadcast by jnp.where -> no (tm, Cp) iota/compare work.
        lane = jax.lax.broadcasted_iota(jnp.int32, (1, c_pad), 1)
        lane_mask = lane < c_actual
    else:
        lane_mask = None

    f_pad = w11_ref.shape[1]

    def layernorm(v, gamma, beta):
        # Padded input lanes are exactly zero (wrapper invariant), so the sum
        # over the padded width with 1/C gives the true mean.
        mu = jnp.sum(v, axis=-1, keepdims=True) * inv_c
        centered = v - mu
        if lane_mask is not None:
            centered = jnp.where(lane_mask, centered, 0.0)
        var = jnp.sum(centered * centered, axis=-1, keepdims=True) * inv_c
        # gamma/beta padded lanes are zero -> normalized padded lanes stay zero.
        return centered * jax.lax.rsqrt(var + LN_EPS) * gamma + beta

    def channel_mlp(xn, w1_ref, b1_ref, w2_ref, b2_ref):
        """fc1 -> GELU -> fc2 with the hidden dim tiled in chunks of tile_f."""
        xn_b = xn.astype(w1_ref.dtype)
        acc = jnp.zeros((xn.shape[0], c_pad), jnp.float32)
        # Static Python loop -> static ref slices (zero-cost views); only a
        # (tm, tile_f) hidden activation is live at any time.
        for f0 in range(0, f_pad, tile_f):
            fs = min(tile_f, f_pad - f0)
            h = jnp.dot(xn_b, w1_ref[:, f0:f0 + fs],
                        preferred_element_type=jnp.float32) + b1_ref[:, f0:f0 + fs]
            if exact_gelu:
                # Exact erf GELU (PyTorch nn.GELU() default), f32.
                h = 0.5 * h * (1.0 + jax.lax.erf(h * jnp.float32(_SQRT_HALF)))
                h = h.astype(w2_ref.dtype)
            else:
                # tanh-approx GELU in bf16: tanh -> EUP slot on v6e/v7x, bf16
                # doubles VPU throughput; |err| vs exact erf GELU < ~3e-3.
                hb = h.astype(w2_ref.dtype)
                inner = _SQRT_2_OVER_PI * (hb + 0.044715 * (hb * hb * hb))
                h = 0.5 * hb * (1.0 + jnp.tanh(inner))
            acc = acc + jnp.dot(h, w2_ref[f0:f0 + fs, :],
                                preferred_element_type=jnp.float32)
        return acc + b2_ref[...]

    # residual branch 1: norm1 -> channel_mlp1
    y1 = x + channel_mlp(layernorm(x, g1_ref[...], be1_ref[...]),
                         w11_ref, b11_ref, w12_ref, b12_ref)
    # residual branch 2: norm2 -> channel_mlp2
    y2 = y1 + channel_mlp(layernorm(y1, g2_ref[...], be2_ref[...]),
                          w21_ref, b21_ref, w22_ref, b22_ref)
    o_ref[...] = y2.astype(o_ref.dtype)


def _pick_tile_rows(n_rows, c_pad, tile_f, x_bytes, out_bytes, w_bytes,
                    max_tile, vmem_budget):
    """Largest row tile that fits the budget; >=8 grid steps on large problems."""
    per_row = (2 * c_pad * x_bytes          # double-buffered input rows
               + 2 * c_pad * out_bytes      # double-buffered output rows
               + 24 * c_pad                 # live f32 LN / residual / accumulator
               + 16 * tile_f)               # live hidden chunk (f32 + bf16 copies)
    avail = vmem_budget - w_bytes
    if avail < per_row * 8:
        avail = per_row * 8                 # minimal-but-valid tile; guarded later
    tm = min(max_tile, avail // per_row)
    tm = max(8, (tm // 8) * 8)

    rows8 = _round_up(max(n_rows, 8), 8)
    # Aim for >= 8 grid steps on large problems (>= 4 pipelined steps per TC on
    # v7x megacore) but never shrink the MXU M-tile below 256 rows.
    step_cap = _round_up(_cdiv(rows8, 8), 8)
    tm = min(tm, max(step_cap, min(256, rows8)))
    tm = min(tm, rows8)
    return tm, per_row


def mlp_block(src, params, *, max_tile_rows=1024, vmem_budget_bytes=None,
              hidden_tile=512, exact_gelu=False):
    """src: (B, H, W, C) NHWC. Returns same shape/dtype."""
    B, H, W, C = src.shape
    F = params["w11"].shape[1]
    N = B * H * W

    Cp = _round_up(C, 128)
    Fp = _round_up(F, 128)
    tile_f = min(Fp, _round_up(max(hidden_tile, 128), 128))

    def pad2(a, r, c):
        a = jnp.asarray(a)
        return jnp.pad(a, ((0, r - a.shape[0]), (0, c - a.shape[1])))

    wdt = jnp.bfloat16
    # LayerNorm affine + biases stay f32; matmul operands are bf16 (f32 accum).
    g1 = pad2(params["g1"].astype(jnp.float32), 1, Cp)
    be1 = pad2(params["be1"].astype(jnp.float32), 1, Cp)
    w11 = pad2(params["w11"], Cp, Fp).astype(wdt)
    b11 = pad2(params["b11"].astype(jnp.float32), 1, Fp)
    w12 = pad2(params["w12"], Fp, Cp).astype(wdt)
    b12 = pad2(params["b12"].astype(jnp.float32), 1, Cp)
    g2 = pad2(params["g2"].astype(jnp.float32), 1, Cp)
    be2 = pad2(params["be2"].astype(jnp.float32), 1, Cp)
    w21 = pad2(params["w21"], Cp, Fp).astype(wdt)
    b21 = pad2(params["b21"].astype(jnp.float32), 1, Fp)
    w22 = pad2(params["w22"], Fp, Cp).astype(wdt)
    b22 = pad2(params["b22"].astype(jnp.float32), 1, Cp)

    # Per-generation VMEM sizing (v5e/v6e: 128 MiB, v7x: 64 MiB per TC).
    cap = _vmem_capacity_bytes()
    budget = vmem_budget_bytes if vmem_budget_bytes is not None else int(cap * 3 // 4)

    x_bytes = jnp.dtype(src.dtype).itemsize
    # Single-copy resident parameter bytes: 4 bf16 weight mats + small f32 vecs.
    w_bytes = 4 * Cp * Fp * 2 + (6 * Cp + 2 * Fp) * 4
    tm, per_row = _pick_tile_rows(N, Cp, tile_f, x_bytes, x_bytes, w_bytes,
                                  max_tile_rows, budget)
    Np = _round_up(N, tm)

    need = w_bytes + tm * per_row + 4 * 1024 * 1024
    if need > cap - 4 * 1024 * 1024:
        # TODO(synk): stream the weight matrices per grid step when they do not
        # fit VMEM next to the activation row tiles.
        raise ValueError(
            f"MLPBlock weights + minimum activation tiles need ~{need >> 20} MiB "
            f"VMEM but only {cap >> 20} MiB is available on this TPU generation.")
    vmem_limit = int(min(cap - 4 * 1024 * 1024, max(32 * 1024 * 1024, need)))

    # Activations: skip wrapper-side pad/slice HBM passes when nothing to pad.
    x2 = src.reshape(N, C)
    if Np != N or Cp != C:
        x2 = jnp.pad(x2, ((0, Np - N), (0, Cp - C)))

    row_spec = pl.BlockSpec((tm, Cp), lambda i: (i, 0))
    # Parameters: whole-array VMEM-resident (copied once, no double-buffering).
    vmem_full = pl.BlockSpec(memory_space=pltpu.MemorySpace.VMEM)
    param_specs = [vmem_full] * 12

    # Advisory cost for the XLA scheduler.
    flops = 8 * Np * Cp * Fp                      # 4 matmuls (2*M*K*N each)
    transcendentals = 2 * Np * Fp + 4 * Np        # GELU on both hidden tensors + rsqrt
    bytes_accessed = (Np * Cp * 2 * x_bytes       # activation in + out
                      + 4 * Cp * Fp * 2           # bf16 weights
                      + (6 * Cp + 2 * Fp) * 4)    # small vectors
    cost = pl.CostEstimate(flops=int(flops),
                           transcendentals=int(transcendentals),
                           bytes_accessed=int(bytes_accessed))

    out = pl.pallas_call(
        functools.partial(mlp_block_kernel, C, tile_f, exact_gelu),
        out_shape=jax.ShapeDtypeStruct((Np, Cp), src.dtype),
        grid_spec=pltpu.PrefetchScalarGridSpec(
            num_scalar_prefetch=0,
            grid=(Np // tm,),
            in_specs=[row_spec] + param_specs,
            out_specs=row_spec,
        ),
        compiler_params=pltpu.CompilerParams(
            dimension_semantics=("parallel",),
            vmem_limit_bytes=vmem_limit,
        ),
        cost_estimate=cost,
    )(x2, g1, be1, w11, b11, w12, b12, g2, be2, w21, b21, w22, b22)

    if Np != N or Cp != C:
        out = out[:N, :C]
    return out.reshape(B, H, W, C)


def _reference(src, p):
    """Plain-JAX f32 reference (exact erf GELU, PyTorch semantics)."""
    x = src.astype(jnp.float32)

    def ln_mlp(x, g, b, w1, b1, w2, b2):
        mu = jnp.mean(x, -1, keepdims=True)
        var = jnp.mean(jnp.square(x - mu), -1, keepdims=True)
        xn = (x - mu) * jax.lax.rsqrt(var + LN_EPS) * g + b
        h = xn @ w1 + b1
        h = 0.5 * h * (1.0 + jax.lax.erf(h * jnp.float32(_SQRT_HALF)))
        return h @ w2 + b2

    y1 = x + ln_mlp(x, p["g1"], p["be1"], p["w11"], p["b11"], p["w12"], p["b12"])
    y2 = y1 + ln_mlp(y1, p["g2"], p["be2"], p["w21"], p["b21"], p["w22"], p["b22"])
    return y2.astype(src.dtype)


def init_params(key, d_model, dim_feedforward):
    ks = jax.random.split(key, 8)
    s_in = 1.0 / jnp.sqrt(d_model)
    s_hid = 1.0 / jnp.sqrt(dim_feedforward)
    return {
        # LayerNorm1
        "g1": jnp.ones((1, d_model), jnp.float32),
        "be1": jnp.zeros((1, d_model), jnp.float32),
        # channel_mlp1 (fc1: d_model->F, fc2: F->d_model), stored as (in, out)
        "w11": jax.random.uniform(ks[0], (d_model, dim_feedforward), jnp.float32, -s_in, s_in),
        "b11": jax.random.uniform(ks[1], (1, dim_feedforward), jnp.float32, -s_in, s_in),
        "w12": jax.random.uniform(ks[2], (dim_feedforward, d_model), jnp.float32, -s_hid, s_hid),
        "b12": jax.random.uniform(ks[3], (1, d_model), jnp.float32, -s_hid, s_hid),
        # LayerNorm2
        "g2": jnp.ones((1, d_model), jnp.float32),
        "be2": jnp.zeros((1, d_model), jnp.float32),
        # channel_mlp2
        "w21": jax.random.uniform(ks[4], (d_model, dim_feedforward), jnp.float32, -s_in, s_in),
        "b21": jax.random.uniform(ks[5], (1, dim_feedforward), jnp.float32, -s_in, s_in),
        "w22": jax.random.uniform(ks[6], (dim_feedforward, d_model), jnp.float32, -s_hid, s_hid),
        "b22": jax.random.uniform(ks[7], (1, d_model), jnp.float32, -s_hid, s_hid),
    }


if __name__ == "__main__":
    B, H, W = 2, 8, 8
    d_model, dim_feedforward = 16, 32

    key = jax.random.PRNGKey(0)
    k_x, k_p = jax.random.split(key)
    src = jax.random.normal(k_x, (B, H, W, d_model), jnp.float32)
    params = init_params(k_p, d_model, dim_feedforward)

    out = jax.block_until_ready(mlp_block(src, params))

    ref = _reference(src, params)
    assert out.shape == src.shape and out.dtype == src.dtype
    # bf16 matmul operands + tanh-approx GELU -> looser tolerance than pure f32.
    max_err = float(jnp.max(jnp.abs(out.astype(jnp.float32) - ref.astype(jnp.float32))))
    assert jnp.allclose(out, ref, rtol=5e-2, atol=5e-2), (
        f"mismatch vs reference (max abs err {max_err})")

    print("KERNEL_OK")
</pallas_src>

<mosaic_0001>
module attributes {stable_mosaic.version = 11 : i64} {
  func.func @mlp_block_kernel(%arg0: i32, %arg1: memref<128x128xf32, #tpu.memory_space<vmem>>, %arg2: memref<1x128xf32, #tpu.memory_space<vmem>>, %arg3: memref<1x128xf32, #tpu.memory_space<vmem>>, %arg4: memref<128x128xbf16, #tpu.memory_space<vmem>>, %arg5: memref<1x128xf32, #tpu.memory_space<vmem>>, %arg6: memref<128x128xbf16, #tpu.memory_space<vmem>>, %arg7: memref<1x128xf32, #tpu.memory_space<vmem>>, %arg8: memref<1x128xf32, #tpu.memory_space<vmem>>, %arg9: memref<1x128xf32, #tpu.memory_space<vmem>>, %arg10: memref<128x128xbf16, #tpu.memory_space<vmem>>, %arg11: memref<1x128xf32, #tpu.memory_space<vmem>>, %arg12: memref<128x128xbf16, #tpu.memory_space<vmem>>, %arg13: memref<1x128xf32, #tpu.memory_space<vmem>>, %arg14: memref<128x128xf32, #tpu.memory_space<vmem>>) attributes {dimension_semantics = [#tpu.dimension_semantics<parallel>], iteration_bounds = array<i64: 1>, scalar_prefetch = 0 : i64, scratch_operands = 0 : i64, tpu.core_type = #tpu.core_type<tc>, window_params = [{transform_indices = @transform_0, window_bounds = array<i64: 128, 128>}, {pipeline_mode = #tpu.pipeline_mode<synchronous>, transform_indices = @transform_1, window_bounds = array<i64: 1, 128>}, {pipeline_mode = #tpu.pipeline_mode<synchronous>, transform_indices = @transform_2, window_bounds = array<i64: 1, 128>}, {pipeline_mode = #tpu.pipeline_mode<synchronous>, transform_indices = @transform_3, window_bounds = array<i64: 128, 128>}, {pipeline_mode = #tpu.pipeline_mode<synchronous>, transform_indices = @transform_4, window_bounds = array<i64: 1, 128>}, {pipeline_mode = #tpu.pipeline_mode<synchronous>, transform_indices = @transform_5, window_bounds = array<i64: 128, 128>}, {pipeline_mode = #tpu.pipeline_mode<synchronous>, transform_indices = @transform_6, window_bounds = array<i64: 1, 128>}, {pipeline_mode = #tpu.pipeline_mode<synchronous>, transform_indices = @transform_7, window_bounds = array<i64: 1, 128>}, {pipeline_mode = #tpu.pipeline_mode<synchronous>, transform_indices = @transform_8, window_bounds = array<i64: 1, 128>}, {pipeline_mode = #tpu.pipeline_mode<synchronous>, transform_indices = @transform_9, window_bounds = array<i64: 128, 128>}, {pipeline_mode = #tpu.pipeline_mode<synchronous>, transform_indices = @transform_10, window_bounds = array<i64: 1, 128>}, {pipeline_mode = #tpu.pipeline_mode<synchronous>, transform_indices = @transform_11, window_bounds = array<i64: 128, 128>}, {pipeline_mode = #tpu.pipeline_mode<synchronous>, transform_indices = @transform_12, window_bounds = array<i64: 1, 128>}, {transform_indices = @transform_13, window_bounds = array<i64: 128, 128>}]} {
    %c0 = arith.constant 0 : index
    %c0_0 = arith.constant 0 : index
    %0 = vector.load %arg1[%c0, %c0_0] : memref<128x128xf32, #tpu.memory_space<vmem>>, vector<128x128xf32>
    %1 = tpu.iota {dimensions = array<i32: 1>} : vector<1x128xi32>
    %c16_i32 = arith.constant 16 : i32
    %2 = vector.broadcast %c16_i32 : i32 to vector<1x128xi32>
    %3 = arith.cmpi slt, %1, %2 : vector<1x128xi32>
    %c0_1 = arith.constant 0 : index
    %c0_2 = arith.constant 0 : index
    %4 = vector.load %arg2[%c0_1, %c0_2] : memref<1x128xf32, #tpu.memory_space<vmem>>, vector<1x128xf32>
    %c0_3 = arith.constant 0 : index
    %c0_4 = arith.constant 0 : index
    %5 = vector.load %arg3[%c0_3, %c0_4] : memref<1x128xf32, #tpu.memory_space<vmem>>, vector<1x128xf32>
    %cst = arith.constant dense<0.000000e+00> : vector<128xf32>
    %6 = vector.multi_reduction <add>, %0, %cst [1] : vector<128x128xf32> to vector<128xf32>
    %7 = vector.shape_cast %6 : vector<128xf32> to vector<128x1xf32>
    %cst_5 = arith.constant 6.250000e-02 : f32
    %8 = vector.broadcast %cst_5 : f32 to vector<128x1xf32>
    %9 = arith.mulf %7, %8 : vector<128x1xf32>
    %10 = vector.broadcast %9 : vector<128x1xf32> to vector<128x128xf32>
    %11 = arith.subf %0, %10 : vector<128x128xf32>
    %cst_6 = arith.constant 0.000000e+00 : f32
    %12 = vector.shape_cast %3 : vector<1x128xi1> to vector<1x128xi1>
    %13 = vector.broadcast %12 : vector<1x128xi1> to vector<128x128xi1>
    %14 = vector.broadcast %cst_6 : f32 to vector<128x128xf32>
    %15 = arith.select %13, %11, %14 : vector<128x128xi1>, vector<128x128xf32>
    %16 = arith.mulf %15, %15 : vector<128x128xf32>
    %cst_7 = arith.constant dense<0.000000e+00> : vector<128xf32>
    %17 = vector.multi_reduction <add>, %16, %cst_7 [1] : vector<128x128xf32> to vector<128xf32>
    %18 = vector.shape_cast %17 : vector<128xf32> to vector<128x1xf32>
    %cst_8 = arith.constant 6.250000e-02 : f32
    %19 = vector.broadcast %cst_8 : f32 to vector<128x1xf32>
    %20 = arith.mulf %18, %19 : vector<128x1xf32>
    %cst_9 = arith.constant 9.99999974E-6 : f32
    %21 = vector.broadcast %cst_9 : f32 to vector<128x1xf32>
    %22 = arith.addf %20, %21 : vector<128x1xf32>
    %23 = math.rsqrt %22 : vector<128x1xf32>
    %24 = vector.broadcast %23 : vector<128x1xf32> to vector<128x128xf32>
    %25 = arith.mulf %15, %24 : vector<128x128xf32>
    %26 = vector.broadcast %4 : vector<1x128xf32> to vector<128x128xf32>
    %27 = arith.mulf %25, %26 : vector<128x128xf32>
    %28 = vector.broadcast %5 : vector<1x128xf32> to vector<128x128xf32>
    %29 = arith.addf %27, %28 : vector<128x128xf32>
    %30 = arith.truncf %29 : vector<128x128xf32> to vector<128x128xbf16>
    %cst_10 = arith.constant 0.000000e+00 : f32
    %31 = vector.broadcast %cst_10 : f32 to vector<128x128xf32>
    %c0_11 = arith.constant 0 : index
    %c0_12 = arith.constant 0 : index
    %32 = vector.load %arg4[%c0_11, %c0_12] : memref<128x128xbf16, #tpu.memory_space<vmem>>, vector<128x128xbf16>
    %cst_13 = arith.constant dense<0.000000e+00> : vector<128x128xf32>
    %33 = tpu.matmul %30, %32, %cst_13 {dimension_numbers = #tpu.dot_dimension_numbers<[1], [0], [0], [1], [0, 0, 1, 1], [], []>} : vector<128x128xbf16>, vector<128x128xbf16>, vector<128x128xf32> -> vector<128x128xf32>
    %c0_14 = arith.constant 0 : index
    %c0_15 = arith.constant 0 : index
    %34 = vector.load %arg5[%c0_14, %c0_15] : memref<1x128xf32, #tpu.memory_space<vmem>>, vector<1x128xf32>
    %35 = vector.broadcast %34 : vector<1x128xf32> to vector<128x128xf32>
    %36 = arith.addf %33, %35 : vector<128x128xf32>
    %37 = arith.truncf %36 : vector<128x128xf32> to vector<128x128xbf16>
    %38 = arith.mulf %37, %37 : vector<128x128xbf16>
    %39 = arith.mulf %38, %37 : vector<128x128xbf16>
    %cst_16 = arith.constant 4.467770e-02 : bf16
    %40 = vector.broadcast %cst_16 : bf16 to vector<128x128xbf16>
    %41 = arith.mulf %40, %39 : vector<128x128xbf16>
    %42 = arith.addf %37, %41 : vector<128x128xbf16>
    %cst_17 = arith.constant 7.968750e-01 : bf16
    %43 = vector.broadcast %cst_17 : bf16 to vector<128x128xbf16>
    %44 = arith.mulf %43, %42 : vector<128x128xbf16>
    %cst_18 = arith.constant 5.000000e-01 : bf16
    %45 = vector.broadcast %cst_18 : bf16 to vector<128x128xbf16>
    %46 = arith.mulf %45, %37 : vector<128x128xbf16>
    %47 = math.tanh %44 : vector<128x128xbf16>
    %cst_19 = arith.constant 1.000000e+00 : bf16
    %48 = vector.broadcast %cst_19 : bf16 to vector<128x128xbf16>
    %49 = arith.addf %48, %47 : vector<128x128xbf16>
    %50 = arith.mulf %46, %49 : vector<128x128xbf16>
    %c0_20 = arith.constant 0 : index
    %c0_21 = arith.constant 0 : index
    %51 = vector.load %arg6[%c0_20, %c0_21] : memref<128x128xbf16, #tpu.memory_space<vmem>>, vector<128x128xbf16>
    %cst_22 = arith.constant dense<0.000000e+00> : vector<128x128xf32>
    %52 = tpu.matmul %50, %51, %cst_22 {dimension_numbers = #tpu.dot_dimension_numbers<[1], [0], [0], [1], [0, 0, 1, 1], [], []>} : vector<128x128xbf16>, vector<128x128xbf16>, vector<128x128xf32> -> vector<128x128xf32>
    %53 = arith.addf %31, %52 : vector<128x128xf32>
    %c0_23 = arith.constant 0 : index
    %c0_24 = arith.constant 0 : index
    %54 = vector.load %arg7[%c0_23, %c0_24] : memref<1x128xf32, #tpu.memory_space<vmem>>, vector<1x128xf32>
    %55 = vector.broadcast %54 : vector<1x128xf32> to vector<128x128xf32>
    %56 = arith.addf %53, %55 : vector<128x128xf32>
    %57 = arith.addf %0, %56 : vector<128x128xf32>
    %c0_25 = arith.constant 0 : index
    %c0_26 = arith.constant 0 : index
    %58 = vector.load %arg8[%c0_25, %c0_26] : memref<1x128xf32, #tpu.memory_space<vmem>>, vector<1x128xf32>
    %c0_27 = arith.constant 0 : index
    %c0_28 = arith.constant 0 : index
    %59 = vector.load %arg9[%c0_27, %c0_28] : memref<1x128xf32, #tpu.memory_space<vmem>>, vector<1x128xf32>
    %cst_29 = arith.constant dense<0.000000e+00> : vector<128xf32>
    %60 = vector.multi_reduction <add>, %57, %cst_29 [1] : vector<128x128xf32> to vector<128xf32>
    %61 = vector.shape_cast %60 : vector<128xf32> to vector<128x1xf32>
    %cst_30 = arith.constant 6.250000e-02 : f32
    %62 = vector.broadcast %cst_30 : f32 to vector<128x1xf32>
    %63 = arith.mulf %61, %62 : vector<128x1xf32>
    %64 = vector.broadcast %63 : vector<128x1xf32> to vector<128x128xf32>
    %65 = arith.subf %57, %64 : vector<128x128xf32>
    %cst_31 = arith.constant 0.000000e+00 : f32
    %66 = vector.shape_cast %3 : vector<1x128xi1> to vector<1x128xi1>
    %67 = vector.broadcast %66 : vector<1x128xi1> to vector<128x128xi1>
    %68 = vector.broadcast %cst_31 : f32 to vector<128x128xf32>
    %69 = arith.select %67, %65, %68 : vector<128x128xi1>, vector<128x128xf32>
    %70 = arith.mulf %69, %69 : vector<128x128xf32>
    %cst_32 = arith.constant dense<0.000000e+00> : vector<128xf32>
    %71 = vector.multi_reduction <add>, %70, %cst_32 [1] : vector<128x128xf32> to vector<128xf32>
    %72 = vector.shape_cast %71 : vector<128xf32> to vector<128x1xf32>
    %cst_33 = arith.constant 6.250000e-02 : f32
    %73 = vector.broadcast %cst_33 : f32 to vector<128x1xf32>
    %74 = arith.mulf %72, %73 : vector<128x1xf32>
    %cst_34 = arith.constant 9.99999974E-6 : f32
    %75 = vector.broadcast %cst_34 : f32 to vector<128x1xf32>
    %76 = arith.addf %74, %75 : vector<128x1xf32>
    %77 = math.rsqrt %76 : vector<128x1xf32>
    %78 = vector.broadcast %77 : vector<128x1xf32> to vector<128x128xf32>
    %79 = arith.mulf %69, %78 : vector<128x128xf32>
    %80 = vector.broadcast %58 : vector<1x128xf32> to vector<128x128xf32>
    %81 = arith.mulf %79, %80 : vector<128x128xf32>
    %82 = vector.broadcast %59 : vector<1x128xf32> to vector<128x128xf32>
    %83 = arith.addf %81, %82 : vector<128x128xf32>
    %84 = arith.truncf %83 : vector<128x128xf32> to vector<128x128xbf16>
    %cst_35 = arith.constant 0.000000e+00 : f32
    %85 = vector.broadcast %cst_35 : f32 to vector<128x128xf32>
    %c0_36 = arith.constant 0 : index
    %c0_37 = arith.constant 0 : index
    %86 = vector.load %arg10[%c0_36, %c0_37] : memref<128x128xbf16, #tpu.memory_space<vmem>>, vector<128x128xbf16>
    %cst_38 = arith.constant dense<0.000000e+00> : vector<128x128xf32>
    %87 = tpu.matmul %84, %86, %cst_38 {dimension_numbers = #tpu.dot_dimension_numbers<[1], [0], [0], [1], [0, 0, 1, 1], [], []>} : vector<128x128xbf16>, vector<128x128xbf16>, vector<128x128xf32> -> vector<128x128xf32>
    %c0_39 = arith.constant 0 : index
    %c0_40 = arith.constant 0 : index
    %88 = vector.load %arg11[%c0_39, %c0_40] : memref<1x128xf32, #tpu.memory_space<vmem>>, vector<1x128xf32>
    %89 = vector.broadcast %88 : vector<1x128xf32> to vector<128x128xf32>
    %90 = arith.addf %87, %89 : vector<128x128xf32>
    %91 = arith.truncf %90 : vector<128x128xf32> to vector<128x128xbf16>
    %92 = arith.mulf %91, %91 : vector<128x128xbf16>
    %93 = arith.mulf %92, %91 : vector<128x128xbf16>
    %cst_41 = arith.constant 4.467770e-02 : bf16
    %94 = vector.broadcast %cst_41 : bf16 to vector<128x128xbf16>
    %95 = arith.mulf %94, %93 : vector<128x128xbf16>
    %96 = arith.addf %91, %95 : vector<128x128xbf16>
    %cst_42 = arith.constant 7.968750e-01 : bf16
    %97 = vector.broadcast %cst_42 : bf16 to vector<128x128xbf16>
    %98 = arith.mulf %97, %96 : vector<128x128xbf16>
    %cst_43 = arith.constant 5.000000e-01 : bf16
    %99 = vector.broadcast %cst_43 : bf16 to vector<128x128xbf16>
    %100 = arith.mulf %99, %91 : vector<128x128xbf16>
    %101 = math.tanh %98 : vector<128x128xbf16>
    %cst_44 = arith.constant 1.000000e+00 : bf16
    %102 = vector.broadcast %cst_44 : bf16 to vector<128x128xbf16>
    %103 = arith.addf %102, %101 : vector<128x128xbf16>
    %104 = arith.mulf %100, %103 : vector<128x128xbf16>
    %c0_45 = arith.constant 0 : index
    %c0_46 = arith.constant 0 : index
    %105 = vector.load %arg12[%c0_45, %c0_46] : memref<128x128xbf16, #tpu.memory_space<vmem>>, vector<128x128xbf16>
    %cst_47 = arith.constant dense<0.000000e+00> : vector<128x128xf32>
    %106 = tpu.matmul %104, %105, %cst_47 {dimension_numbers = #tpu.dot_dimension_numbers<[1], [0], [0], [1], [0, 0, 1, 1], [], []>} : vector<128x128xbf16>, vector<128x128xbf16>, vector<128x128xf32> -> vector<128x128xf32>
    %107 = arith.addf %85, %106 : vector<128x128xf32>
    %c0_48 = arith.constant 0 : index
    %c0_49 = arith.constant 0 : index
    %108 = vector.load %arg13[%c0_48, %c0_49] : memref<1x128xf32, #tpu.memory_space<vmem>>, vector<1x128xf32>
    %109 = vector.broadcast %108 : vector<1x128xf32> to vector<128x128xf32>
    %110 = arith.addf %107, %109 : vector<128x128xf32>
    %111 = arith.addf %57, %110 : vector<128x128xf32>
    %c0_50 = arith.constant 0 : index
    %c0_51 = arith.constant 0 : index
    %112 = vector.load %arg14[%c0_50, %c0_51] : memref<128x128xf32, #tpu.memory_space<vmem>>, vector<128x128xf32>
    tpu.vector_store %arg14[%c0_50, %c0_51], %111 {strides = array<i32>} : memref<128x128xf32, #tpu.memory_space<vmem>>, vector<128x128xf32>,
    return
  }
  func.func @transform_0(%arg0: i32) -> (i32, i32) {
    %c0_i32 = arith.constant 0 : i32
    %c0_i32_0 = arith.constant 0 : i32
    return %arg0, %c0_i32 : i32, i32
  }
  func.func @transform_1(%arg0: i32) -> (i32, i32) {
    %c0_i32 = arith.constant 0 : i32
    %c0_i32_0 = arith.constant 0 : i32
    %c0_i32_1 = arith.constant 0 : i32
    return %c0_i32, %c0_i32_0 : i32, i32
  }
  func.func @transform_2(%arg0: i32) -> (i32, i32) {
    %c0_i32 = arith.constant 0 : i32
    %c0_i32_0 = arith.constant 0 : i32
    %c0_i32_1 = arith.constant 0 : i32
    return %c0_i32, %c0_i32_0 : i32, i32
  }
  func.func @transform_3(%arg0: i32) -> (i32, i32) {
    %c0_i32 = arith.constant 0 : i32
    %c0_i32_0 = arith.constant 0 : i32
    %c0_i32_1 = arith.constant 0 : i32
    return %c0_i32, %c0_i32_0 : i32, i32
  }
  func.func @transform_4(%arg0: i32) -> (i32, i32) {
    %c0_i32 = arith.constant 0 : i32
    %c0_i32_0 = arith.constant 0 : i32
    %c0_i32_1 = arith.constant 0 : i32
    return %c0_i32, %c0_i32_0 : i32, i32
  }
  func.func @transform_5(%arg0: i32) -> (i32, i32) {
    %c0_i32 = arith.constant 0 : i32
    %c0_i32_0 = arith.constant 0 : i32
    %c0_i32_1 = arith.constant 0 : i32
    return %c0_i32, %c0_i32_0 : i32, i32
  }
  func.func @transform_6(%arg0: i32) -> (i32, i32) {
    %c0_i32 = arith.constant 0 : i32
    %c0_i32_0 = arith.constant 0 : i32
    %c0_i32_1 = arith.constant 0 : i32
    return %c0_i32, %c0_i32_0 : i32, i32
  }
  func.func @transform_7(%arg0: i32) -> (i32, i32) {
    %c0_i32 = arith.constant 0 : i32
    %c0_i32_0 = arith.constant 0 : i32
    %c0_i32_1 = arith.constant 0 : i32
    return %c0_i32, %c0_i32_0 : i32, i32
  }
  func.func @transform_8(%arg0: i32) -> (i32, i32) {
    %c0_i32 = arith.constant 0 : i32
    %c0_i32_0 = arith.constant 0 : i32
    %c0_i32_1 = arith.constant 0 : i32
    return %c0_i32, %c0_i32_0 : i32, i32
  }
  func.func @transform_9(%arg0: i32) -> (i32, i32) {
    %c0_i32 = arith.constant 0 : i32
    %c0_i32_0 = arith.constant 0 : i32
    %c0_i32_1 = arith.constant 0 : i32
    return %c0_i32, %c0_i32_0 : i32, i32
  }
  func.func @transform_10(%arg0: i32) -> (i32, i32) {
    %c0_i32 = arith.constant 0 : i32
    %c0_i32_0 = arith.constant 0 : i32
    %c0_i32_1 = arith.constant 0 : i32
    return %c0_i32, %c0_i32_0 : i32, i32
  }
  func.func @transform_11(%arg0: i32) -> (i32, i32) {
    %c0_i32 = arith.constant 0 : i32
    %c0_i32_0 = arith.constant 0 : i32
    %c0_i32_1 = arith.constant 0 : i32
    return %c0_i32, %c0_i32_0 : i32, i32
  }
  func.func @transform_12(%arg0: i32) -> (i32, i32) {
    %c0_i32 = arith.constant 0 : i32
    %c0_i32_0 = arith.constant 0 : i32
    %c0_i32_1 = arith.constant 0 : i32
    return %c0_i32, %c0_i32_0 : i32, i32
  }
  func.func @transform_13(%arg0: i32) -> (i32, i32) {
    %c0_i32 = arith.constant 0 : i32
    %c0_i32_0 = arith.constant 0 : i32
    return %arg0, %c0_i32 : i32, i32
  }
}

</mosaic_0001>

<llo_original>
// kernel: tpu_custom_call.1
$region0: #{tpu_custom_call.1}
  #allocation0 [shape = 'u32[]', space=smem, size = 0x4, offset = 0x4, fixed_abs, tag = 'smem constant byte address 0x4 - core index']
  #allocation1 [shape = 'u32[144,128]{1,0:T(1,128)}', space=vmem, size = 0x12000, scoped, tag = 'internal scratch']
  %s0 = inlined_call_operand.hbm [shape: f32[128,128], index: 0, kind: input, shape index: {}]
  %s1 = inlined_call_operand.vmem [shape: f32[1,128], index: 1, kind: input, shape index: {}]
  %s2 = inlined_call_operand.vmem [shape: f32[1,128], index: 2, kind: input, shape index: {}]
  %s3 = inlined_call_operand.hbm [shape: bf16[128,128], index: 3, kind: input, shape index: {}]
  %s4 = inlined_call_operand.vmem [shape: f32[1,128], index: 4, kind: input, shape index: {}]
  %s5 = inlined_call_operand.hbm [shape: bf16[128,128], index: 5, kind: input, shape index: {}]
  %s6 = inlined_call_operand.vmem [shape: f32[1,128], index: 6, kind: input, shape index: {}]
  %s7 = inlined_call_operand.vmem [shape: f32[1,128], index: 7, kind: input, shape index: {}]
  %s8 = inlined_call_operand.vmem [shape: f32[1,128], index: 8, kind: input, shape index: {}]
  %s9 = inlined_call_operand.hbm [shape: bf16[128,128], index: 9, kind: input, shape index: {}]
  %s10 = inlined_call_operand.vmem [shape: f32[1,128], index: 10, kind: input, shape index: {}]
  %s11 = inlined_call_operand.hbm [shape: bf16[128,128], index: 11, kind: input, shape index: {}]
  %s12 = inlined_call_operand.vmem [shape: f32[1,128], index: 12, kind: input, shape index: {}]
  %s13 = inlined_call_operand.hbm [shape: f32[128,128], index: 13, kind: output, shape index: {}]
  %s14 = sld [smem:[#allocation0]]
  $region82: #{tpu_custom_call.1} parent=0
    _
  %s16 = ssub.s32 1, %s14
  %s17 = scalar_select 0, %s16, %s14
  $region1: #{tpu_custom_call.1} parent=0
    #allocation2 [shape = 'u8[65536]{0}', space=vmem, size = 0x10000, scoped, tag = 'input window, operand 0, single buffered']
    #allocation3 [shape = 's32[1]{0}', space=sflag, size = 0x4, scoped, tag = 'scoped memory for tpu_custom_call.1']
    #allocation4 [shape = 's32[1]{0}', space=sflag, size = 0x4, scoped, tag = 'scoped memory for tpu_custom_call.1']
    #allocation5 [shape = 'u8[32768]{0}', space=vmem, size = 0x8000, scoped, tag = 'input window, operand 3, single buffered']
    #allocation6 [shape = 's32[1]{0}', space=sflag, size = 0x4, scoped, tag = 'scoped memory for tpu_custom_call.1']
    #allocation7 [shape = 'u8[32768]{0}', space=vmem, size = 0x8000, scoped, tag = 'input window, operand 5, single buffered']
    #allocation8 [shape = 'u8[32768]{0}', space=vmem, size = 0x8000, scoped, tag = 'input window, operand 9, single buffered']
    #allocation9 [shape = 's32[1]{0}', space=sflag, size = 0x4, scoped, tag = 'scoped memory for tpu_custom_call.1']
    #allocation10 [shape = 'u8[32768]{0}', space=vmem, size = 0x8000, scoped, tag = 'input window, operand 11, single buffered']
    #allocation11 [shape = 'u8[65536]{0}', space=vmem, size = 0x10000, scoped, tag = 'output window, operand 0, single buffered']
    %18 = vsyncpa [#allocation3], 0
    %19 = vsyncpa [#allocation6], 0
    %20 = vsyncpa [#allocation9], 0
    %21 = vsyncpa [#allocation4], 0
    // Predicated region
    $region2: #{tpu_custom_call.1} parent=1 // pred_check
      _
    $region3: #{tpu_custom_call.1} parent=1 // pred_check_branch
      %23 = sbr.rel (0) target = $region5
    $region4: #{tpu_custom_call.1} parent=1 // pred_region
      %s25 = ssub.s32 2048, 2048
      %26 = vsyncadd [#allocation3], %s25
      %s27 = sshll.u32 [#allocation2], 4
      %s28 = int_to_ptr.vmem [resolvable:$true] %s27
      %33 = dma.hbm_to_vmem [thread:$0]  %s0, 2048, %s28, [#allocation3], 128, 128, 8
    $region5: #{tpu_custom_call.1} parent=1 // pred_fallthru
      _
    // Predicated region
    $region6: #{tpu_custom_call.1} parent=1 // pred_check
      _
    $region7: #{tpu_custom_call.1} parent=1 // pred_check_branch
      %35 = sbr.rel (0) target = $region9
    $region8: #{tpu_custom_call.1} parent=1 // pred_region
      _
    $region9: #{tpu_custom_call.1} parent=1 // pred_fallthru
      _
    // Predicated region
    $region10: #{tpu_custom_call.1} parent=1 // pred_check
      _
    $region11: #{tpu_custom_call.1} parent=1 // pred_check_branch
      %37 = sbr.rel (0) target = $region13
    $region12: #{tpu_custom_call.1} parent=1 // pred_region
      _
    $region13: #{tpu_custom_call.1} parent=1 // pred_fallthru
      _
    // Predicated region
    $region14: #{tpu_custom_call.1} parent=1 // pred_check
      _
    $region15: #{tpu_custom_call.1} parent=1 // pred_check_branch
      %39 = sbr.rel (0) target = $region17
    $region16: #{tpu_custom_call.1} parent=1 // pred_region
      %s41 = ssub.s32 1024, 1024
      %42 = vsyncadd [#allocation6], %s41
      %s43 = sshll.u32 [#allocation5], 4
      %s44 = int_to_ptr.vmem [resolvable:$true] %s43
      %49 = dma.hbm_to_vmem [thread:$0]  %s3, 1024, %s44, [#allocation6], 64, 64, 4
    $region17: #{tpu_custom_call.1} parent=1 // pred_fallthru
      _
    // Predicated region
    $region18: #{tpu_custom_call.1} parent=1 // pred_check
      _
    $region19: #{tpu_custom_call.1} parent=1 // pred_check_branch
      %51 = sbr.rel (0) target = $region21
    $region20: #{tpu_custom_call.1} parent=1 // pred_region
      _
    $region21: #{tpu_custom_call.1} parent=1 // pred_fallthru
      _
    // Predicated region
    $region22: #{tpu_custom_call.1} parent=1 // pred_check
      _
    $region23: #{tpu_custom_call.1} parent=1 // pred_check_branch
      %53 = sbr.rel (0) target = $region25
    $region24: #{tpu_custom_call.1} parent=1 // pred_region
      %s55 = ssub.s32 1024, 1024
      %56 = vsyncadd [#allocation6], %s55
      %s57 = sshll.u32 [#allocation7], 4
      %s58 = int_to_ptr.vmem [resolvable:$true] %s57
      %63 = dma.hbm_to_vmem [thread:$0]  %s5, 1024, %s58, [#allocation6], 64, 64, 4
    $region25: #{tpu_custom_call.1} parent=1 // pred_fallthru
      _
    // Predicated region
    $region26: #{tpu_custom_call.1} parent=1 // pred_check
      _
    $region27: #{tpu_custom_call.1} parent=1 // pred_check_branch
      %65 = sbr.rel (0) target = $region29
    $region28: #{tpu_custom_call.1} parent=1 // pred_region
      _
    $region29: #{tpu_custom_call.1} parent=1 // pred_fallthru
      _
    // Predicated region
    $region30: #{tpu_custom_call.1} parent=1 // pred_check
      _
    $region31: #{tpu_custom_call.1} parent=1 // pred_check_branch
      %67 = sbr.rel (0) target = $region33
    $region32: #{tpu_custom_call.1} parent=1 // pred_region
      _
    $region33: #{tpu_custom_call.1} parent=1 // pred_fallthru
      _
    // Predicated region
    $region34: #{tpu_custom_call.1} parent=1 // pred_check
      _
    $region35: #{tpu_custom_call.1} parent=1 // pred_check_branch
      %69 = sbr.rel (0) target = $region37
    $region36: #{tpu_custom_call.1} parent=1 // pred_region
      _
    $region37: #{tpu_custom_call.1} parent=1 // pred_fallthru
      _
    // Predicated region
    $region38: #{tpu_custom_call.1} parent=1 // pred_check
      _
    $region39: #{tpu_custom_call.1} parent=1 // pred_check_branch
      %71 = sbr.rel (0) target = $region41
    $region40: #{tpu_custom_call.1} parent=1 // pred_region
      %s73 = ssub.s32 1024, 1024
      %74 = vsyncadd [#allocation9], %s73
      %s75 = sshll.u32 [#allocation8], 4
      %s76 = int_to_ptr.vmem [resolvable:$true] %s75
      %81 = dma.hbm_to_vmem [thread:$0]  %s9, 1024, %s76, [#allocation9], 64, 64, 4
    $region41: #{tpu_custom_call.1} parent=1 // pred_fallthru
      _
    // Predicated region
    $region42: #{tpu_custom_call.1} parent=1 // pred_check
      _
    $region43: #{tpu_custom_call.1} parent=1 // pred_check_branch
      %83 = sbr.rel (0) target = $region45
    $region44: #{tpu_custom_call.1} parent=1 // pred_region
      _
    $region45: #{tpu_custom_call.1} parent=1 // pred_fallthru
      _
    // Predicated region
    $region46: #{tpu_custom_call.1} parent=1 // pred_check
      _
    $region47: #{tpu_custom_call.1} parent=1 // pred_check_branch
      %85 = sbr.rel (0) target = $region49
    $region48: #{tpu_custom_call.1} parent=1 // pred_region
      %s87 = ssub.s32 1024, 1024
      %88 = vsyncadd [#allocation9], %s87
      %s89 = sshll.u32 [#allocation10], 4
      %s90 = int_to_ptr.vmem [resolvable:$true] %s89
      %95 = dma.hbm_to_vmem [thread:$0]  %s11, 1024, %s90, [#allocation9], 64, 64, 4
    $region49: #{tpu_custom_call.1} parent=1 // pred_fallthru
      _
    // Predicated region
    $region50: #{tpu_custom_call.1} parent=1 // pred_check
      _
    $region51: #{tpu_custom_call.1} parent=1 // pred_check_branch
      %97 = sbr.rel (0) target = $region53
    $region52: #{tpu_custom_call.1} parent=1 // pred_region
      _
    $region53: #{tpu_custom_call.1} parent=1 // pred_fallthru
      _
    // Predicated region
    $region54: #{tpu_custom_call.1} parent=1 // pred_check
      _
    $region55: #{tpu_custom_call.1} parent=1 // pred_check_branch
      %99 = sbr.rel (0) target = $region57
    $region56: #{tpu_custom_call.1} parent=1 // pred_region
      %100 = dma.done [#allocation3], 2048
    $region57: #{tpu_custom_call.1} parent=1 // pred_fallthru
      _
    // Predicated region
    $region58: #{tpu_custom_call.1} parent=1 // pred_check
      _
    $region59: #{tpu_custom_call.1} parent=1 // pred_check_branch
      %102 = sbr.rel (0) target = $region61
    $region60: #{tpu_custom_call.1} parent=1 // pred_region
      %103 = dma.done [#allocation6], 1024
    $region61: #{tpu_custom_call.1} parent=1 // pred_fallthru
      _
    // Predicated region
    $region62: #{tpu_custom_call.1} parent=1 // pred_check
      _
    $region63: #{tpu_custom_call.1} parent=1 // pred_check_branch
      %105 = sbr.rel (0) target = $region65
    $region64: #{tpu_custom_call.1} parent=1 // pred_region
      %106 = dma.done [#allocation6], 1024
    $region65: #{tpu_custom_call.1} parent=1 // pred_fallthru
      _
    // Predicated region
    $region66: #{tpu_custom_call.1} parent=1 // pred_check
      _
    $region67: #{tpu_custom_call.1} parent=1 // pred_check_branch
      %108 = sbr.rel (0) target = $region69
    $region68: #{tpu_custom_call.1} parent=1 // pred_region
      %109 = dma.done [#allocation9], 1024
    $region69: #{tpu_custom_call.1} parent=1 // pred_fallthru
      _
    // Predicated region
    $region70: #{tpu_custom_call.1} parent=1 // pred_check
      _
    $region71: #{tpu_custom_call.1} parent=1 // pred_check_branch
      %111 = sbr.rel (0) target = $region73
    $region72: #{tpu_custom_call.1} parent=1 // pred_region
      %112 = dma.done [#allocation9], 1024
    $region73: #{tpu_custom_call.1} parent=1 // pred_fallthru
      _
    %v118 = vld [vmem:[#allocation2] sm:$0xff]
    %v119 = vld [vmem:[#allocation2 + $0x8] sm:$0xff]
    %v120 = vld [vmem:[#allocation2 + $0x10] sm:$0xff]
    %v121 = vld [vmem:[#allocation2 + $0x18] sm:$0xff]
    %v122 = vld [vmem:[#allocation2 + $0x20] sm:$0xff]
    %v123 = vld [vmem:[#allocation2 + $0x28] sm:$0xff]
    %v124 = vld [vmem:[#allocation2 + $0x30] sm:$0xff]
    %v125 = vld [vmem:[#allocation2 + $0x38] sm:$0xff]
    %v126 = vld [vmem:[#allocation2 + $0x40] sm:$0xff]
    %v127 = vld [vmem:[#allocation2 + $0x48] sm:$0xff]
    %v128 = vld [vmem:[#allocation2 + $0x50] sm:$0xff]
    %v129 = vld [vmem:[#allocation2 + $0x58] sm:$0xff]
    %v130 = vld [vmem:[#allocation2 + $0x60] sm:$0xff]
    %v131 = vld [vmem:[#allocation2 + $0x68] sm:$0xff]
    %v132 = vld [vmem:[#allocation2 + $0x70] sm:$0xff]
    %v133 = vld [vmem:[#allocation2 + $0x78] sm:$0xff]
    %v134 = vlaneseq
    %v135 = vand.u32 %v134, 127
    %vm136 = vcmp.lt.s32.totalorder %v135, 16
    %v137 = vld [vmem:[%s1] sm:$0x1]
    %v138 = vld [vmem:[%s2] sm:$0x1]
    %139 = vadd.xlane.f32.xlu0 %v118
    %v140 = vpop.xlane.xlu0 %139
    %141 = vadd.xlane.f32.xlu0 %v119
    %v142 = vpop.xlane.xlu0 %141
    %143 = vadd.xlane.f32.xlu0 %v120
    %v144 = vpop.xlane.xlu0 %143
    %145 = vadd.xlane.f32.xlu0 %v121
    %v146 = vpop.xlane.xlu0 %145
    %147 = vadd.xlane.f32.xlu0 %v122
    %v148 = vpop.xlane.xlu0 %147
    %149 = vadd.xlane.f32.xlu0 %v123
    %v150 = vpop.xlane.xlu0 %149
    %151 = vadd.xlane.f32.xlu0 %v124
    %v152 = vpop.xlane.xlu0 %151
    %153 = vadd.xlane.f32.xlu0 %v125
    %v154 = vpop.xlane.xlu0 %153
    %155 = vadd.xlane.f32.xlu0 %v126
    %v156 = vpop.xlane.xlu0 %155
    %157 = vadd.xlane.f32.xlu0 %v127
    %v158 = vpop.xlane.xlu0 %157
    %159 = vadd.xlane.f32.xlu0 %v128
    %v160 = vpop.xlane.xlu0 %159
    %161 = vadd.xlane.f32.xlu0 %v129
    %v162 = vpop.xlane.xlu0 %161
    %163 = vadd.xlane.f32.xlu0 %v130
    %v164 = vpop.xlane.xlu0 %163
    %165 = vadd.xlane.f32.xlu0 %v131
    %v166 = vpop.xlane.xlu0 %165
    %167 = vadd.xlane.f32.xlu0 %v132
    %v168 = vpop.xlane.xlu0 %167
    %169 = vadd.xlane.f32.xlu0 %v133
    %v170 = vpop.xlane.xlu0 %169
    %v171 = vmul.f32 %v140, 0.0625
    %v172 = vmul.f32 %v142, 0.0625
    %v173 = vmul.f32 %v144, 0.0625
    %v174 = vmul.f32 %v146, 0.0625
    %v175 = vmul.f32 %v148, 0.0625
    %v176 = vmul.f32 %v150, 0.0625
    %v177 = vmul.f32 %v152, 0.0625
    %v178 = vmul.f32 %v154, 0.0625
    %v179 = vmul.f32 %v156, 0.0625
    %v180 = vmul.f32 %v158, 0.0625
    %v181 = vmul.f32 %v160, 0.0625
    %v182 = vmul.f32 %v162, 0.0625
    %v183 = vmul.f32 %v164, 0.0625
    %v184 = vmul.f32 %v166, 0.0625
    %v185 = vmul.f32 %v168, 0.0625
    %v186 = vmul.f32 %v170, 0.0625
    %v187 = vsub.f32 %v118, %v171
    %v188 = vsub.f32 %v119, %v172
    %v189 = vsub.f32 %v120, %v173
    %v190 = vsub.f32 %v121, %v174
    %v191 = vsub.f32 %v122, %v175
    %v192 = vsub.f32 %v123, %v176
    %v193 = vsub.f32 %v124, %v177
    %v194 = vsub.f32 %v125, %v178
    %v195 = vsub.f32 %v126, %v179
    %v196 = vsub.f32 %v127, %v180
    %v197 = vsub.f32 %v128, %v181
    %v198 = vsub.f32 %v129, %v182
    %v199 = vsub.f32 %v130, %v183
    %v200 = vsub.f32 %v131, %v184
    %v201 = vsub.f32 %v132, %v185
    %v202 = vsub.f32 %v133, %v186
    %v203 = vsel %vm136, 1, 0
    %vm204 = vcmp.eq.s32.totalorder %v203, 1
    %v205 = vsel %vm204, %v187, 0.0
    %v206 = vsel %vm204, %v188, 0.0
    %v207 = vsel %vm204, %v189, 0.0
    %v208 = vsel %vm204, %v190, 0.0
    %v209 = vsel %vm204, %v191, 0.0
    %v210 = vsel %vm204, %v192, 0.0
    %v211 = vsel %vm204, %v193, 0.0
    %v212 = vsel %vm204, %v194, 0.0
    %v213 = vsel %vm204, %v195, 0.0
    %v214 = vsel %vm204, %v196, 0.0
    %v215 = vsel %vm204, %v197, 0.0
    %v216 = vsel %vm204, %v198, 0.0
    %v217 = vsel %vm204, %v199, 0.0
    %v218 = vsel %vm204, %v200, 0.0
    %v219 = vsel %vm204, %v201, 0.0
    %v220 = vsel %vm204, %v202, 0.0
    %v221 = vmul.f32 %v205, %v205
    %v222 = vmul.f32 %v206, %v206
    %v223 = vmul.f32 %v207, %v207
    %v224 = vmul.f32 %v208, %v208
    %v225 = vmul.f32 %v209, %v209
    %v226 = vmul.f32 %v210, %v210
    %v227 = vmul.f32 %v211, %v211
    %v228 = vmul.f32 %v212, %v212
    %v229 = vmul.f32 %v213, %v213
    %v230 = vmul.f32 %v214, %v214
    %v231 = vmul.f32 %v215, %v215
    %v232 = vmul.f32 %v216, %v216
    %v233 = vmul.f32 %v217, %v217
    %v234 = vmul.f32 %v218, %v218
    %v235 = vmul.f32 %v219, %v219
    %v236 = vmul.f32 %v220, %v220
    %237 = vadd.xlane.f32.xlu0 %v221
    %v238 = vpop.xlane.xlu0 %237
    %239 = vadd.xlane.f32.xlu0 %v222
    %v240 = vpop.xlane.xlu0 %239
    %241 = vadd.xlane.f32.xlu0 %v223
    %v242 = vpop.xlane.xlu0 %241
    %243 = vadd.xlane.f32.xlu0 %v224
    %v244 = vpop.xlane.xlu0 %243
    %245 = vadd.xlane.f32.xlu0 %v225
    %v246 = vpop.xlane.xlu0 %245
    %247 = vadd.xlane.f32.xlu0 %v226
    %v248 = vpop.xlane.xlu0 %247
    %249 = vadd.xlane.f32.xlu0 %v227
    %v250 = vpop.xlane.xlu0 %249
    %251 = vadd.xlane.f32.xlu0 %v228
    %v252 = vpop.xlane.xlu0 %251
    %253 = vadd.xlane.f32.xlu0 %v229
    %v254 = vpop.xlane.xlu0 %253
    %255 = vadd.xlane.f32.xlu0 %v230
    %v256 = vpop.xlane.xlu0 %255
    %257 = vadd.xlane.f32.xlu0 %v231
    %v258 = vpop.xlane.xlu0 %257
    %259 = vadd.xlane.f32.xlu0 %v232
    %v260 = vpop.xlane.xlu0 %259
    %261 = vadd.xlane.f32.xlu0 %v233
    %v262 = vpop.xlane.xlu0 %261
    %263 = vadd.xlane.f32.xlu0 %v234
    %v264 = vpop.xlane.xlu0 %263
    %265 = vadd.xlane.f32.xlu0 %v235
    %v266 = vpop.xlane.xlu0 %265
    %267 = vadd.xlane.f32.xlu0 %v236
    %v268 = vpop.xlane.xlu0 %267
    %v269 = vmul.f32 %v238, 0.0625
    %v270 = vmul.f32 %v240, 0.0625
    %v271 = vmul.f32 %v242, 0.0625
    %v272 = vmul.f32 %v244, 0.0625
    %v273 = vmul.f32 %v246, 0.0625
    %v274 = vmul.f32 %v248, 0.0625
    %v275 = vmul.f32 %v250, 0.0625
    %v276 = vmul.f32 %v252, 0.0625
    %v277 = vmul.f32 %v254, 0.0625
    %v278 = vmul.f32 %v256, 0.0625
    %v279 = vmul.f32 %v258, 0.0625
    %v280 = vmul.f32 %v260, 0.0625
    %v281 = vmul.f32 %v262, 0.0625
    %v282 = vmul.f32 %v264, 0.0625
    %v283 = vmul.f32 %v266, 0.0625
    %v284 = vmul.f32 %v268, 0.0625
    %v285 = vadd.f32 %v269, 1e-05
    %v286 = vadd.f32 %v270, 1e-05
    %v287 = vadd.f32 %v271, 1e-05
    %v288 = vadd.f32 %v272, 1e-05
    %v289 = vadd.f32 %v273, 1e-05
    %v290 = vadd.f32 %v274, 1e-05
    %v291 = vadd.f32 %v275, 1e-05
    %v292 = vadd.f32 %v276, 1e-05
    %v293 = vadd.f32 %v277, 1e-05
    %v294 = vadd.f32 %v278, 1e-05
    %v295 = vadd.f32 %v279, 1e-05
    %v296 = vadd.f32 %v280, 1e-05
    %v297 = vadd.f32 %v281, 1e-05
    %v298 = vadd.f32 %v282, 1e-05
    %v299 = vadd.f32 %v283, 1e-05
    %v300 = vadd.f32 %v284, 1e-05
    %v301 = vrsqrt.pop %v285
    %v302 = vrsqrt.pop %v286
    %v303 = vrsqrt.pop %v287
    %v304 = vrsqrt.pop %v288
    %v305 = vrsqrt.pop %v289
    %v306 = vrsqrt.pop %v290
    %v307 = vrsqrt.pop %v291
    %v308 = vrsqrt.pop %v292
    %v309 = vrsqrt.pop %v293
    %v310 = vrsqrt.pop %v294
    %v311 = vrsqrt.pop %v295
    %v312 = vrsqrt.pop %v296
    %v313 = vrsqrt.pop %v297
    %v314 = vrsqrt.pop %v298
    %v315 = vrsqrt.pop %v299
    %v316 = vrsqrt.pop %v300
    %v317 = vmul.f32 %v205, %v301
    %v318 = vmul.f32 %v206, %v302
    %v319 = vmul.f32 %v207, %v303
    %v320 = vmul.f32 %v208, %v304
    %v321 = vmul.f32 %v209, %v305
    %v322 = vmul.f32 %v210, %v306
    %v323 = vmul.f32 %v211, %v307
    %v324 = vmul.f32 %v212, %v308
    %v325 = vmul.f32 %v213, %v309
    %v326 = vmul.f32 %v214, %v310
    %v327 = vmul.f32 %v215, %v311
    %v328 = vmul.f32 %v216, %v312
    %v329 = vmul.f32 %v217, %v313
    %v330 = vmul.f32 %v218, %v314
    %v331 = vmul.f32 %v219, %v315
    %v332 = vmul.f32 %v220, %v316
    %v334 = vlaneseq
    %v335 = vshrl.u32 %v334, 7
    %v336 = vsub.s32 0, %v335
    %v337 = vrot.slane %v137, %v336
    %v339 = vmul.f32 %v317, %v337
    %v340 = vmul.f32 %v318, %v337
    %v341 = vmul.f32 %v319, %v337
    %v342 = vmul.f32 %v320, %v337
    %v343 = vmul.f32 %v321, %v337
    %v344 = vmul.f32 %v322, %v337
    %v345 = vmul.f32 %v323, %v337
    %v346 = vmul.f32 %v324, %v337
    %v347 = vmul.f32 %v325, %v337
    %v348 = vmul.f32 %v326, %v337
    %v349 = vmul.f32 %v327, %v337
    %v350 = vmul.f32 %v328, %v337
    %v351 = vmul.f32 %v329, %v337
    %v352 = vmul.f32 %v330, %v337
    %v353 = vmul.f32 %v331, %v337
    %v354 = vmul.f32 %v332, %v337
    %v356 = vlaneseq
    %v357 = vshrl.u32 %v356, 7
    %v358 = vsub.s32 0, %v357
    %v359 = vrot.slane %v138, %v358
    %v361 = vadd.f32 %v339, %v359
    %v362 = vadd.f32 %v340, %v359
    %v363 = vadd.f32 %v341, %v359
    %v364 = vadd.f32 %v342, %v359
    %v365 = vadd.f32 %v343, %v359
    %v366 = vadd.f32 %v344, %v359
    %v367 = vadd.f32 %v345, %v359
    %v368 = vadd.f32 %v346, %v359
    %v369 = vadd.f32 %v347, %v359
    %v370 = vadd.f32 %v348, %v359
    %v371 = vadd.f32 %v349, %v359
    %v372 = vadd.f32 %v350, %v359
    %v373 = vadd.f32 %v351, %v359
    %v374 = vadd.f32 %v352, %v359
    %v375 = vadd.f32 %v353, %v359
    %v376 = vadd.f32 %v354, %v359
    %v377 = vpack.c.bf16 %v362, %v361
    %v378 = vpack.c.bf16 %v364, %v363
    %v379 = vpack.c.bf16 %v366, %v365
    %v380 = vpack.c.bf16 %v368, %v367
    %v381 = vpack.c.bf16 %v370, %v369
    %v382 = vpack.c.bf16 %v372, %v371
    %v383 = vpack.c.bf16 %v374, %v373
    %v384 = vpack.c.bf16 %v376, %v375
    %v385 = vld [vmem:[#allocation5] sm:$0xf]
    %v386 = vld [vmem:[#allocation5 + $0x4] sm:$0xf]
    %v387 = vld [vmem:[#allocation5 + $0x8] sm:$0xf]
    %v388 = vld [vmem:[#allocation5 + $0xc] sm:$0xf]
    %v389 = vld [vmem:[#allocation5 + $0x10] sm:$0xf]
    %v390 = vld [vmem:[#allocation5 + $0x14] sm:$0xf]
    %v391 = vld [vmem:[#allocation5 + $0x18] sm:$0xf]
    %v392 = vld [vmem:[#allocation5 + $0x1c] sm:$0xf]
    %v393 = vld [vmem:[#allocation5 + $0x20] sm:$0xf]
    %v394 = vld [vmem:[#allocation5 + $0x24] sm:$0xf]
    %v395 = vld [vmem:[#allocation5 + $0x28] sm:$0xf]
    %v396 = vld [vmem:[#allocation5 + $0x2c] sm:$0xf]
    %v397 = vld [vmem:[#allocation5 + $0x30] sm:$0xf]
    %v398 = vld [vmem:[#allocation5 + $0x34] sm:$0xf]
    %v399 = vld [vmem:[#allocation5 + $0x38] sm:$0xf]
    %v400 = vld [vmem:[#allocation5 + $0x3c] sm:$0xf]
    %v401 = vld [vmem:[%s4] sm:$0x1]
    %v403 = vlaneseq
    %v404 = vshrl.u32 %v403, 7
    %v405 = vsub.s32 0, %v404
    %v406 = vrot.slane %v401, %v405
    %v424 = vunpack.c.l.b16 %v385
    %v425 = vunpack.c.l.b16 %v386
    %v426 = vunpack.c.l.b16 %v387
    %v427 = vunpack.c.l.b16 %v388
    %v428 = vunpack.c.l.b16 %v389
    %v429 = vunpack.c.l.b16 %v390
    %v430 = vunpack.c.l.b16 %v391
    %v431 = vunpack.c.l.b16 %v392
    %v432 = vunpack.c.l.b16 %v393
    %v433 = vunpack.c.l.b16 %v394
    %v434 = vunpack.c.l.b16 %v395
    %v435 = vunpack.c.l.b16 %v396
    %v436 = vunpack.c.l.b16 %v397
    %v437 = vunpack.c.l.b16 %v398
    %v438 = vunpack.c.l.b16 %v399
    %v439 = vunpack.c.l.b16 %v400
    %v440 = vpack.c.b16 %v425, %v424
    %v441 = vpack.c.b16 %v427, %v426
    %v442 = vpack.c.b16 %v429, %v428
    %v443 = vpack.c.b16 %v431, %v430
    %v444 = vpack.c.b16 %v433, %v432
    %v445 = vpack.c.b16 %v435, %v434
    %v446 = vpack.c.b16 %v437, %v436
    %v447 = vpack.c.b16 %v439, %v438
    %456 = vmatprep.subr.bf16.mxu0 0
    %457 = vmatpush1.bf16.msra.mxu0 %v440
    %458 = vmatprep.subr.bf16.mxu0 0
    %459 = vmatpush1.bf16.msra.mxu0 %v441
    %460 = vmatprep.subr.bf16.mxu0 0
    %461 = vmatpush1.bf16.msra.mxu0 %v442
    %462 = vmatprep.subr.bf16.mxu0 0
    %463 = vmatpush1.bf16.msra.mxu0 %v443
    %464 = vmatprep.subr.bf16.mxu0 0
    %465 = vmatpush1.bf16.msra.mxu0 %v444
    %466 = vmatprep.subr.bf16.mxu0 0
    %467 = vmatpush1.bf16.msra.mxu0 %v445
    %468 = vmatprep.subr.bf16.mxu0 0
    %469 = vmatpush1.bf16.msra.mxu0 %v446
    %470 = vmatprep.subr.bf16.mxu0 0
    %471 = vmatpush1.bf16.msra.mxu0 %v447
    %472 = vmatprep.subr.bf16.mxu0 0
    %473 = vmatpush1.bf16.msra.mxu0 0
    %474 = vmatprep.subr.bf16.mxu0 0
    %475 = vmatpush1.bf16.msra.mxu0 0
    %476 = vmatprep.subr.bf16.mxu0 0
    %477 = vmatpush1.bf16.msra.mxu0 0
    %478 = vmatprep.subr.bf16.mxu0 0
    %479 = vmatpush1.bf16.msra.mxu0 0
    %480 = vmatprep.subr.bf16.mxu0 0
    %481 = vmatpush1.bf16.msra.mxu0 0
    %482 = vmatprep.subr.bf16.mxu0 0
    %483 = vmatpush1.bf16.msra.mxu0 0
    %484 = vmatprep.subr.bf16.mxu0 0
    %485 = vmatpush1.bf16.msra.mxu0 0
    %486 = vmatprep.subr.bf16.mxu0 0
    %487 = vmatpush1.bf16.msra.mxu0 0
    %488 = vmatprep.mubr.bf16.mxu0 0
    %489 = vmatmul.mubr.bf16.gmra.mrb[0].mxu0 %v377
    %v490 = vpop.f32.mrb[0].mxu0
    %v491 = vadd.f32 %v406, %v490
    %v492 = vpop.f32.mrb[0].mxu0
    %v493 = vpop.f32.mrb[0].mxu0
    %v494 = vadd.f32 %v406, %v493
    %v495 = vpop.f32.mrb[0].mxu0
    %496 = vmatprep.mubr.bf16.mxu0 0
    %497 = vmatmul.mubr.bf16.gmra.mrb[0].mxu0 %v378
    %v498 = vpop.f32.mrb[0].mxu0
    %v499 = vadd.f32 %v406, %v498
    %v500 = vpop.f32.mrb[0].mxu0
    %v501 = vpop.f32.mrb[0].mxu0
    %v502 = vadd.f32 %v406, %v501
    %v503 = vpop.f32.mrb[0].mxu0
    %504 = vmatprep.mubr.bf16.mxu0 0
    %505 = vmatmul.mubr.bf16.gmra.mrb[0].mxu0 %v379
    %v506 = vpop.f32.mrb[0].mxu0
    %v507 = vadd.f32 %v406, %v506
    %v508 = vpop.f32.mrb[0].mxu0
    %v509 = vpop.f32.mrb[0].mxu0
    %v510 = vadd.f32 %v406, %v509
    %v511 = vpop.f32.mrb[0].mxu0
    %512 = vmatprep.mubr.bf16.mxu0 0
    %513 = vmatmul.mubr.bf16.gmra.mrb[0].mxu0 %v380
    %v514 = vpop.f32.mrb[0].mxu0
    %v515 = vadd.f32 %v406, %v514
    %v516 = vpop.f32.mrb[0].mxu0
    %v517 = vpop.f32.mrb[0].mxu0
    %v518 = vadd.f32 %v406, %v517
    %v519 = vpop.f32.mrb[0].mxu0
    %520 = vmatprep.mubr.bf16.mxu0 0
    %521 = vmatmul.mubr.bf16.gmra.mrb[0].mxu0 %v381
    %v522 = vpop.f32.mrb[0].mxu0
    %v523 = vadd.f32 %v406, %v522
    %v524 = vpop.f32.mrb[0].mxu0
    %v525 = vpop.f32.mrb[0].mxu0
    %v526 = vadd.f32 %v406, %v525
    %v527 = vpop.f32.mrb[0].mxu0
    %528 = vmatprep.mubr.bf16.mxu0 0
    %529 = vmatmul.mubr.bf16.gmra.mrb[0].mxu0 %v382
    %v530 = vpop.f32.mrb[0].mxu0
    %v531 = vadd.f32 %v406, %v530
    %v532 = vpop.f32.mrb[0].mxu0
    %v533 = vpop.f32.mrb[0].mxu0
    %v534 = vadd.f32 %v406, %v533
    %v535 = vpop.f32.mrb[0].mxu0
    %536 = vmatprep.mubr.bf16.mxu0 0
    %537 = vmatmul.mubr.bf16.gmra.mrb[0].mxu0 %v383
    %v538 = vpop.f32.mrb[0].mxu0
    %v539 = vadd.f32 %v406, %v538
    %v540 = vpop.f32.mrb[0].mxu0
    %v541 = vpop.f32.mrb[0].mxu0
    %v542 = vadd.f32 %v406, %v541
    %v543 = vpop.f32.mrb[0].mxu0
    %544 = vmatprep.mubr.bf16.mxu0 0
    %545 = vmatmul.mubr.bf16.gmra.mrb[0].mxu0 %v384
    %v546 = vpop.f32.mrb[0].mxu0
    %v547 = vadd.f32 %v406, %v546
    %v548 = vpop.f32.mrb[0].mxu0
    %v549 = vpop.f32.mrb[0].mxu0
    %v550 = vadd.f32 %v406, %v549
    %v551 = vpop.f32.mrb[0].mxu0
    %552 = vdwg.mxu0
    %v553 = vpack.c.bf16 %v494, %v491
    %v554 = vpack.c.bf16 %v502, %v499
    %v555 = vpack.c.bf16 %v510, %v507
    %v556 = vpack.c.bf16 %v518, %v515
    %v557 = vpack.c.bf16 %v526, %v523
    %v558 = vpack.c.bf16 %v534, %v531
    %v559 = vpack.c.bf16 %v542, %v539
    %v560 = vpack.c.bf16 %v550, %v547
    %v561 = vmul.bf16 %v553, %v553
    %v562 = vmul.bf16 %v554, %v554
    %v563 = vmul.bf16 %v555, %v555
    %v564 = vmul.bf16 %v556, %v556
    %v565 = vmul.bf16 %v557, %v557
    %v566 = vmul.bf16 %v558, %v558
    %v567 = vmul.bf16 %v559, %v559
    %v568 = vmul.bf16 %v560, %v560
    %v569 = vmul.bf16 %v561, %v553
    %v570 = vmul.bf16 %v562, %v554
    %v571 = vmul.bf16 %v563, %v555
    %v572 = vmul.bf16 %v564, %v556
    %v573 = vmul.bf16 %v565, %v557
    %v574 = vmul.bf16 %v566, %v558
    %v575 = vmul.bf16 %v567, %v559
    %v576 = vmul.bf16 %v568, %v560
    %v577 = vmul.bf16 %v569, 1027030327
    %v578 = vmul.bf16 %v570, 1027030327
    %v579 = vmul.bf16 %v571, 1027030327
    %v580 = vmul.bf16 %v572, 1027030327
    %v581 = vmul.bf16 %v573, 1027030327
    %v582 = vmul.bf16 %v574, 1027030327
    %v583 = vmul.bf16 %v575, 1027030327
    %v584 = vmul.bf16 %v576, 1027030327
    %v585 = vadd.bf16 %v553, %v577
    %v586 = vadd.bf16 %v554, %v578
    %v587 = vadd.bf16 %v555, %v579
    %v588 = vadd.bf16 %v556, %v580
    %v589 = vadd.bf16 %v557, %v581
    %v590 = vadd.bf16 %v558, %v582
    %v591 = vadd.bf16 %v559, %v583
    %v592 = vadd.bf16 %v560, %v584
    %v593 = vmul.bf16 %v585, 1061961548
    %v594 = vmul.bf16 %v586, 1061961548
    %v595 = vmul.bf16 %v587, 1061961548
    %v596 = vmul.bf16 %v588, 1061961548
    %v597 = vmul.bf16 %v589, 1061961548
    %v598 = vmul.bf16 %v590, 1061961548
    %v599 = vmul.bf16 %v591, 1061961548
    %v600 = vmul.bf16 %v592, 1061961548
    %v601 = vmul.bf16 %v553, 1056980736
    %v602 = vmul.bf16 %v554, 1056980736
    %v603 = vmul.bf16 %v555, 1056980736
    %v604 = vmul.bf16 %v556, 1056980736
    %v605 = vmul.bf16 %v557, 1056980736
    %v606 = vmul.bf16 %v558, 1056980736
    %v607 = vmul.bf16 %v559, 1056980736
    %v608 = vmul.bf16 %v560, 1056980736
    %v609 = vtanh.bf16.pop %v593
    %v610 = vtanh.bf16.pop %v594
    %v611 = vtanh.bf16.pop %v595
    %v612 = vtanh.bf16.pop %v596
    %v613 = vtanh.bf16.pop %v597
    %v614 = vtanh.bf16.pop %v598
    %v615 = vtanh.bf16.pop %v599
    %v616 = vtanh.bf16.pop %v600
    %v617 = vadd.bf16 %v609, 1065369472
    %v618 = vadd.bf16 %v610, 1065369472
    %v619 = vadd.bf16 %v611, 1065369472
    %v620 = vadd.bf16 %v612, 1065369472
    %v621 = vadd.bf16 %v613, 1065369472
    %v622 = vadd.bf16 %v614, 1065369472
    %v623 = vadd.bf16 %v615, 1065369472
    %v624 = vadd.bf16 %v616, 1065369472
    %v625 = vmul.bf16 %v601, %v617
    %v626 = vmul.bf16 %v602, %v618
    %v627 = vmul.bf16 %v603, %v619
    %v628 = vmul.bf16 %v604, %v620
    %v629 = vmul.bf16 %v605, %v621
    %v630 = vmul.bf16 %v606, %v622
    %v631 = vmul.bf16 %v607, %v623
    %v632 = vmul.bf16 %v608, %v624
    %v633 = vld [vmem:[#allocation7] sm:$0xf]
    %v634 = vld [vmem:[#allocation7 + $0x4] sm:$0xf]
    %v635 = vld [vmem:[#allocation7 + $0x8] sm:$0xf]
    %v636 = vld [vmem:[#allocation7 + $0xc] sm:$0xf]
    %v637 = vld [vmem:[#allocation7 + $0x10] sm:$0xf]
    %v638 = vld [vmem:[#allocation7 + $0x14] sm:$0xf]
    %v639 = vld [vmem:[#allocation7 + $0x18] sm:$0xf]
    %v640 = vld [vmem:[#allocation7 + $0x1c] sm:$0xf]
    %v641 = vld [vmem:[#allocation7 + $0x20] sm:$0xf]
    %v642 = vld [vmem:[#allocation7 + $0x24] sm:$0xf]
    %v643 = vld [vmem:[#allocation7 + $0x28] sm:$0xf]
    %v644 = vld [vmem:[#allocation7 + $0x2c] sm:$0xf]
    %v645 = vld [vmem:[#allocation7 + $0x30] sm:$0xf]
    %v646 = vld [vmem:[#allocation7 + $0x34] sm:$0xf]
    %v647 = vld [vmem:[#allocation7 + $0x38] sm:$0xf]
    %v648 = vld [vmem:[#allocation7 + $0x3c] sm:$0xf]
    %v649 = vld [vmem:[%s6] sm:$0x1]
    %v651 = vlaneseq
    %v652 = vshrl.u32 %v651, 7
    %v653 = vsub.s32 0, %v652
    %v654 = vrot.slane %v649, %v653
    %v672 = vunpack.c.l.b16 %v633
    %v673 = vunpack.c.l.b16 %v634
    %v674 = vunpack.c.l.b16 %v635
    %v675 = vunpack.c.l.b16 %v636
    %v676 = vunpack.c.l.b16 %v637
    %v677 = vunpack.c.l.b16 %v638
    %v678 = vunpack.c.l.b16 %v639
    %v679 = vunpack.c.l.b16 %v640
    %v680 = vunpack.c.l.b16 %v641
    %v681 = vunpack.c.l.b16 %v642
    %v682 = vunpack.c.l.b16 %v643
    %v683 = vunpack.c.l.b16 %v644
    %v684 = vunpack.c.l.b16 %v645
    %v685 = vunpack.c.l.b16 %v646
    %v686 = vunpack.c.l.b16 %v647
    %v687 = vunpack.c.l.b16 %v648
    %v688 = vpack.c.b16 %v673, %v672
    %v689 = vpack.c.b16 %v675, %v674
    %v690 = vpack.c.b16 %v677, %v676
    %v691 = vpack.c.b16 %v679, %v678
    %v692 = vpack.c.b16 %v681, %v680
    %v693 = vpack.c.b16 %v683, %v682
    %v694 = vpack.c.b16 %v685, %v684
    %v695 = vpack.c.b16 %v687, %v686
    %704 = vmatprep.subr.bf16.mxu0 0
    %705 = vmatpush1.bf16.msra.mxu0 %v688
    %706 = vmatprep.subr.bf16.mxu0 0
    %707 = vmatpush1.bf16.msra.mxu0 %v689
    %708 = vmatprep.subr.bf16.mxu0 0
    %709 = vmatpush1.bf16.msra.mxu0 %v690
    %710 = vmatprep.subr.bf16.mxu0 0
    %711 = vmatpush1.bf16.msra.mxu0 %v691
    %712 = vmatprep.subr.bf16.mxu0 0
    %713 = vmatpush1.bf16.msra.mxu0 %v692
    %714 = vmatprep.subr.bf16.mxu0 0
    %715 = vmatpush1.bf16.msra.mxu0 %v693
    %716 = vmatprep.subr.bf16.mxu0 0
    %717 = vmatpush1.bf16.msra.mxu0 %v694
    %718 = vmatprep.subr.bf16.mxu0 0
    %719 = vmatpush1.bf16.msra.mxu0 %v695
    %720 = vmatprep.subr.bf16.mxu0 0
    %721 = vmatpush1.bf16.msra.mxu0 0
    %722 = vmatprep.subr.bf16.mxu0 0
    %723 = vmatpush1.bf16.msra.mxu0 0
    %724 = vmatprep.subr.bf16.mxu0 0
    %725 = vmatpush1.bf16.msra.mxu0 0
    %726 = vmatprep.subr.bf16.mxu0 0
    %727 = vmatpush1.bf16.msra.mxu0 0
    %728 = vmatprep.subr.bf16.mxu0 0
    %729 = vmatpush1.bf16.msra.mxu0 0
    %730 = vmatprep.subr.bf16.mxu0 0
    %731 = vmatpush1.bf16.msra.mxu0 0
    %732 = vmatprep.subr.bf16.mxu0 0
    %733 = vmatpush1.bf16.msra.mxu0 0
    %734 = vmatprep.subr.bf16.mxu0 0
    %735 = vmatpush1.bf16.msra.mxu0 0
    %736 = vmatprep.mubr.bf16.mxu0 0
    %737 = vmatmul.mubr.bf16.gmra.mrb[0].mxu0 %v625
    %v738 = vpop.f32.mrb[0].mxu0
    %v739 = vadd.f32 %v654, %v738
    %v740 = vpop.f32.mrb[0].mxu0
    %v741 = vpop.f32.mrb[0].mxu0
    %v742 = vadd.f32 %v654, %v741
    %v743 = vpop.f32.mrb[0].mxu0
    %744 = vmatprep.mubr.bf16.mxu0 0
    %745 = vmatmul.mubr.bf16.gmra.mrb[0].mxu0 %v626
    %v746 = vpop.f32.mrb[0].mxu0
    %v747 = vadd.f32 %v654, %v746
    %v748 = vpop.f32.mrb[0].mxu0
    %v749 = vpop.f32.mrb[0].mxu0
    %v750 = vadd.f32 %v654, %v749
    %v751 = vpop.f32.mrb[0].mxu0
    %752 = vmatprep.mubr.bf16.mxu0 0
    %753 = vmatmul.mubr.bf16.gmra.mrb[0].mxu0 %v627
    %v754 = vpop.f32.mrb[0].mxu0
    %v755 = vadd.f32 %v654, %v754
    %v756 = vpop.f32.mrb[0].mxu0
    %v757 = vpop.f32.mrb[0].mxu0
    %v758 = vadd.f32 %v654, %v757
    %v759 = vpop.f32.mrb[0].mxu0
    %760 = vmatprep.mubr.bf16.mxu0 0
    %761 = vmatmul.mubr.bf16.gmra.mrb[0].mxu0 %v628
    %v762 = vpop.f32.mrb[0].mxu0
    %v763 = vadd.f32 %v654, %v762
    %v764 = vpop.f32.mrb[0].mxu0
    %v765 = vpop.f32.mrb[0].mxu0
    %v766 = vadd.f32 %v654, %v765
    %v767 = vpop.f32.mrb[0].mxu0
    %768 = vmatprep.mubr.bf16.mxu0 0
    %769 = vmatmul.mubr.bf16.gmra.mrb[0].mxu0 %v629
    %v770 = vpop.f32.mrb[0].mxu0
    %v771 = vadd.f32 %v654, %v770
    %v772 = vpop.f32.mrb[0].mxu0
    %v773 = vpop.f32.mrb[0].mxu0
    %v774 = vadd.f32 %v654, %v773
    %v775 = vpop.f32.mrb[0].mxu0
    %776 = vmatprep.mubr.bf16.mxu0 0
    %777 = vmatmul.mubr.bf16.gmra.mrb[0].mxu0 %v630
    %v778 = vpop.f32.mrb[0].mxu0
    %v779 = vadd.f32 %v654, %v778
    %v780 = vpop.f32.mrb[0].mxu0
    %v781 = vpop.f32.mrb[0].mxu0
    %v782 = vadd.f32 %v654, %v781
    %v783 = vpop.f32.mrb[0].mxu0
    %784 = vmatprep.mubr.bf16.mxu0 0
    %785 = vmatmul.mubr.bf16.gmra.mrb[0].mxu0 %v631
    %v786 = vpop.f32.mrb[0].mxu0
    %v787 = vadd.f32 %v654, %v786
    %v788 = vpop.f32.mrb[0].mxu0
    %v789 = vpop.f32.mrb[0].mxu0
    %v790 = vadd.f32 %v654, %v789
    %v791 = vpop.f32.mrb[0].mxu0
    %792 = vmatprep.mubr.bf16.mxu0 0
    %793 = vmatmul.mubr.bf16.gmra.mrb[0].mxu0 %v632
    %v794 = vpop.f32.mrb[0].mxu0
    %v795 = vadd.f32 %v654, %v794
    %v796 = vpop.f32.mrb[0].mxu0
    %v797 = vpop.f32.mrb[0].mxu0
    %v798 = vadd.f32 %v654, %v797
    %v799 = vpop.f32.mrb[0].mxu0
    %800 = vdwg.mxu0
    %v801 = vadd.f32 %v118, %v739
    %v802 = vadd.f32 %v119, %v742
    %v803 = vadd.f32 %v120, %v747
    %v804 = vadd.f32 %v121, %v750
    %v805 = vadd.f32 %v122, %v755
    %v806 = vadd.f32 %v123, %v758
    %v807 = vadd.f32 %v124, %v763
    %v808 = vadd.f32 %v125, %v766
    %v809 = vadd.f32 %v126, %v771
    %v810 = vadd.f32 %v127, %v774
    %v811 = vadd.f32 %v128, %v779
    %v812 = vadd.f32 %v129, %v782
    %v813 = vadd.f32 %v130, %v787
    %v814 = vadd.f32 %v131, %v790
    %v815 = vadd.f32 %v132, %v795
    %v816 = vadd.f32 %v133, %v798
    %v817 = vld [vmem:[%s7] sm:$0x1]
    %v818 = vld [vmem:[%s8] sm:$0x1]
    %819 = vadd.xlane.f32.xlu0 %v801
    %v820 = vpop.xlane.xlu0 %819
    %821 = vadd.xlane.f32.xlu0 %v802
    %v822 = vpop.xlane.xlu0 %821
    %823 = vadd.xlane.f32.xlu0 %v803
    %v824 = vpop.xlane.xlu0 %823
    %825 = vadd.xlane.f32.xlu0 %v804
    %v826 = vpop.xlane.xlu0 %825
    %827 = vadd.xlane.f32.xlu0 %v805
    %v828 = vpop.xlane.xlu0 %827
    %829 = vadd.xlane.f32.xlu0 %v806
    %v830 = vpop.xlane.xlu0 %829
    %831 = vadd.xlane.f32.xlu0 %v807
    %v832 = vpop.xlane.xlu0 %831
    %833 = vadd.xlane.f32.xlu0 %v808
    %v834 = vpop.xlane.xlu0 %833
    %835 = vadd.xlane.f32.xlu0 %v809
    %v836 = vpop.xlane.xlu0 %835
    %837 = vadd.xlane.f32.xlu0 %v810
    %v838 = vpop.xlane.xlu0 %837
    %839 = vadd.xlane.f32.xlu0 %v811
    %v840 = vpop.xlane.xlu0 %839
    %841 = vadd.xlane.f32.xlu0 %v812
    %v842 = vpop.xlane.xlu0 %841
    %843 = vadd.xlane.f32.xlu0 %v813
    %v844 = vpop.xlane.xlu0 %843
    %845 = vadd.xlane.f32.xlu0 %v814
    %v846 = vpop.xlane.xlu0 %845
    %847 = vadd.xlane.f32.xlu0 %v815
    %v848 = vpop.xlane.xlu0 %847
    %849 = vadd.xlane.f32.xlu0 %v816
    %v850 = vpop.xlane.xlu0 %849
    %v851 = vmul.f32 %v820, 0.0625
    %v852 = vmul.f32 %v822, 0.0625
    %v853 = vmul.f32 %v824, 0.0625
    %v854 = vmul.f32 %v826, 0.0625
    %v855 = vmul.f32 %v828, 0.0625
    %v856 = vmul.f32 %v830, 0.0625
    %v857 = vmul.f32 %v832, 0.0625
    %v858 = vmul.f32 %v834, 0.0625
    %v859 = vmul.f32 %v836, 0.0625
    %v860 = vmul.f32 %v838, 0.0625
    %v861 = vmul.f32 %v840, 0.0625
    %v862 = vmul.f32 %v842, 0.0625
    %v863 = vmul.f32 %v844, 0.0625
    %v864 = vmul.f32 %v846, 0.0625
    %v865 = vmul.f32 %v848, 0.0625
    %v866 = vmul.f32 %v850, 0.0625
    %v867 = vsub.f32 %v801, %v851
    %v868 = vsub.f32 %v802, %v852
    %v869 = vsub.f32 %v803, %v853
    %v870 = vsub.f32 %v804, %v854
    %v871 = vsub.f32 %v805, %v855
    %v872 = vsub.f32 %v806, %v856
    %v873 = vsub.f32 %v807, %v857
    %v874 = vsub.f32 %v808, %v858
    %v875 = vsub.f32 %v809, %v859
    %v876 = vsub.f32 %v810, %v860
    %v877 = vsub.f32 %v811, %v861
    %v878 = vsub.f32 %v812, %v862
    %v879 = vsub.f32 %v813, %v863
    %v880 = vsub.f32 %v814, %v864
    %v881 = vsub.f32 %v815, %v865
    %v882 = vsub.f32 %v816, %v866
    %v883 = vsel %vm204, %v867, 0.0
    %v884 = vsel %vm204, %v868, 0.0
    %v885 = vsel %vm204, %v869, 0.0
    %v886 = vsel %vm204, %v870, 0.0
    %v887 = vsel %vm204, %v871, 0.0
    %v888 = vsel %vm204, %v872, 0.0
    %v889 = vsel %vm204, %v873, 0.0
    %v890 = vsel %vm204, %v874, 0.0
    %v891 = vsel %vm204, %v875, 0.0
    %v892 = vsel %vm204, %v876, 0.0
    %v893 = vsel %vm204, %v877, 0.0
    %v894 = vsel %vm204, %v878, 0.0
    %v895 = vsel %vm204, %v879, 0.0
    %v896 = vsel %vm204, %v880, 0.0
    %v897 = vsel %vm204, %v881, 0.0
    %v898 = vsel %vm204, %v882, 0.0
    %v899 = vmul.f32 %v883, %v883
    %v900 = vmul.f32 %v884, %v884
    %v901 = vmul.f32 %v885, %v885
    %v902 = vmul.f32 %v886, %v886
    %v903 = vmul.f32 %v887, %v887
    %v904 = vmul.f32 %v888, %v888
    %v905 = vmul.f32 %v889, %v889
    %v906 = vmul.f32 %v890, %v890
    %v907 = vmul.f32 %v891, %v891
    %v908 = vmul.f32 %v892, %v892
    %v909 = vmul.f32 %v893, %v893
    %v910 = vmul.f32 %v894, %v894
    %v911 = vmul.f32 %v895, %v895
    %v912 = vmul.f32 %v896, %v896
    %v913 = vmul.f32 %v897, %v897
    %v914 = vmul.f32 %v898, %v898
    %915 = vadd.xlane.f32.xlu0 %v899
    %v916 = vpop.xlane.xlu0 %915
    %917 = vadd.xlane.f32.xlu0 %v900
    %v918 = vpop.xlane.xlu0 %917
    %919 = vadd.xlane.f32.xlu0 %v901
    %v920 = vpop.xlane.xlu0 %919
    %921 = vadd.xlane.f32.xlu0 %v902
    %v922 = vpop.xlane.xlu0 %921
    %923 = vadd.xlane.f32.xlu0 %v903
    %v924 = vpop.xlane.xlu0 %923
    %925 = vadd.xlane.f32.xlu0 %v904
    %v926 = vpop.xlane.xlu0 %925
    %927 = vadd.xlane.f32.xlu0 %v905
    %v928 = vpop.xlane.xlu0 %927
    %929 = vadd.xlane.f32.xlu0 %v906
    %v930 = vpop.xlane.xlu0 %929
    %931 = vadd.xlane.f32.xlu0 %v907
    %v932 = vpop.xlane.xlu0 %931
    %933 = vadd.xlane.f32.xlu0 %v908
    %v934 = vpop.xlane.xlu0 %933
    %935 = vadd.xlane.f32.xlu0 %v909
    %v936 = vpop.xlane.xlu0 %935
    %937 = vadd.xlane.f32.xlu0 %v910
    %v938 = vpop.xlane.xlu0 %937
    %939 = vadd.xlane.f32.xlu0 %v911
    %v940 = vpop.xlane.xlu0 %939
    %941 = vadd.xlane.f32.xlu0 %v912
    %v942 = vpop.xlane.xlu0 %941
    %943 = vadd.xlane.f32.xlu0 %v913
    %v944 = vpop.xlane.xlu0 %943
    %945 = vadd.xlane.f32.xlu0 %v914
    %v946 = vpop.xlane.xlu0 %945
    %v947 = vmul.f32 %v916, 0.0625
    %v948 = vmul.f32 %v918, 0.0625
    %v949 = vmul.f32 %v920, 0.0625
    %v950 = vmul.f32 %v922, 0.0625
    %v951 = vmul.f32 %v924, 0.0625
    %v952 = vmul.f32 %v926, 0.0625
    %v953 = vmul.f32 %v928, 0.0625
    %v954 = vmul.f32 %v930, 0.0625
    %v955 = vmul.f32 %v932, 0.0625
    %v956 = vmul.f32 %v934, 0.0625
    %v957 = vmul.f32 %v936, 0.0625
    %v958 = vmul.f32 %v938, 0.0625
    %v959 = vmul.f32 %v940, 0.0625
    %v960 = vmul.f32 %v942, 0.0625
    %v961 = vmul.f32 %v944, 0.0625
    %v962 = vmul.f32 %v946, 0.0625
    %v963 = vadd.f32 %v947, 1e-05
    %v964 = vadd.f32 %v948, 1e-05
    %v965 = vadd.f32 %v949, 1e-05
    %v966 = vadd.f32 %v950, 1e-05
    %v967 = vadd.f32 %v951, 1e-05
    %v968 = vadd.f32 %v952, 1e-05
    %v969 = vadd.f32 %v953, 1e-05
    %v970 = vadd.f32 %v954, 1e-05
    %v971 = vadd.f32 %v955, 1e-05
    %v972 = vadd.f32 %v956, 1e-05
    %v973 = vadd.f32 %v957, 1e-05
    %v974 = vadd.f32 %v958, 1e-05
    %v975 = vadd.f32 %v959, 1e-05
    %v976 = vadd.f32 %v960, 1e-05
    %v977 = vadd.f32 %v961, 1e-05
    %v978 = vadd.f32 %v962, 1e-05
    %v979 = vrsqrt.pop %v963
    %v980 = vrsqrt.pop %v964
    %v981 = vrsqrt.pop %v965
    %v982 = vrsqrt.pop %v966
    %v983 = vrsqrt.pop %v967
    %v984 = vrsqrt.pop %v968
    %v985 = vrsqrt.pop %v969
    %v986 = vrsqrt.pop %v970
    %v987 = vrsqrt.pop %v971
    %v988 = vrsqrt.pop %v972
    %v989 = vrsqrt.pop %v973
    %v990 = vrsqrt.pop %v974
    %v991 = vrsqrt.pop %v975
    %v992 = vrsqrt.pop %v976
    %v993 = vrsqrt.pop %v977
    %v994 = vrsqrt.pop %v978
    %v995 = vmul.f32 %v883, %v979
    %v996 = vmul.f32 %v884, %v980
    %v997 = vmul.f32 %v885, %v981
    %v998 = vmul.f32 %v886, %v982
    %v999 = vmul.f32 %v887, %v983
    %v1000 = vmul.f32 %v888, %v984
    %v1001 = vmul.f32 %v889, %v985
    %v1002 = vmul.f32 %v890, %v986
    %v1003 = vmul.f32 %v891, %v987
    %v1004 = vmul.f32 %v892, %v988
    %v1005 = vmul.f32 %v893, %v989
    %v1006 = vmul.f32 %v894, %v990
    %v1007 = vmul.f32 %v895, %v991
    %v1008 = vmul.f32 %v896, %v992
    %v1009 = vmul.f32 %v897, %v993
    %v1010 = vmul.f32 %v898, %v994
    %v1012 = vlaneseq
    %v1013 = vshrl.u32 %v1012, 7
    %v1014 = vsub.s32 0, %v1013
    %v1015 = vrot.slane %v817, %v1014
    %v1017 = vmul.f32 %v995, %v1015
    %v1018 = vmul.f32 %v996, %v1015
    %v1019 = vmul.f32 %v997, %v1015
    %v1020 = vmul.f32 %v998, %v1015
    %v1021 = vmul.f32 %v999, %v1015
    %v1022 = vmul.f32 %v1000, %v1015
    %v1023 = vmul.f32 %v1001, %v1015
    %v1024 = vmul.f32 %v1002, %v1015
    %v1025 = vmul.f32 %v1003, %v1015
    %v1026 = vmul.f32 %v1004, %v1015
    %v1027 = vmul.f32 %v1005, %v1015
    %v1028 = vmul.f32 %v1006, %v1015
    %v1029 = vmul.f32 %v1007, %v1015
    %v1030 = vmul.f32 %v1008, %v1015
    %v1031 = vmul.f32 %v1009, %v1015
    %v1032 = vmul.f32 %v1010, %v1015
    %v1034 = vlaneseq
    %v1035 = vshrl.u32 %v1034, 7
    %v1036 = vsub.s32 0, %v1035
    %v1037 = vrot.slane %v818, %v1036
    %v1039 = vadd.f32 %v1017, %v1037
    %v1040 = vadd.f32 %v1018, %v1037
    %v1041 = vadd.f32 %v1019, %v1037
    %v1042 = vadd.f32 %v1020, %v1037
    %v1043 = vadd.f32 %v1021, %v1037
    %v1044 = vadd.f32 %v1022, %v1037
    %v1045 = vadd.f32 %v1023, %v1037
    %v1046 = vadd.f32 %v1024, %v1037
    %v1047 = vadd.f32 %v1025, %v1037
    %v1048 = vadd.f32 %v1026, %v1037
    %v1049 = vadd.f32 %v1027, %v1037
    %v1050 = vadd.f32 %v1028, %v1037
    %v1051 = vadd.f32 %v1029, %v1037
    %v1052 = vadd.f32 %v1030, %v1037
    %v1053 = vadd.f32 %v1031, %v1037
    %v1054 = vadd.f32 %v1032, %v1037
    %v1055 = vpack.c.bf16 %v1040, %v1039
    %v1056 = vpack.c.bf16 %v1042, %v1041
    %v1057 = vpack.c.bf16 %v1044, %v1043
    %v1058 = vpack.c.bf16 %v1046, %v1045
    %v1059 = vpack.c.bf16 %v1048, %v1047
    %v1060 = vpack.c.bf16 %v1050, %v1049
    %v1061 = vpack.c.bf16 %v1052, %v1051
    %v1062 = vpack.c.bf16 %v1054, %v1053
    %v1063 = vld [vmem:[#allocation8] sm:$0xf]
    %v1064 = vld [vmem:[#allocation8 + $0x4] sm:$0xf]
    %v1065 = vld [vmem:[#allocation8 + $0x8] sm:$0xf]
    %v1066 = vld [vmem:[#allocation8 + $0xc] sm:$0xf]
    %v1067 = vld [vmem:[#allocation8 + $0x10] sm:$0xf]
    %v1068 = vld [vmem:[#allocation8 + $0x14] sm:$0xf]
    %v1069 = vld [vmem:[#allocation8 + $0x18] sm:$0xf]
    %v1070 = vld [vmem:[#allocation8 + $0x1c] sm:$0xf]
    %v1071 = vld [vmem:[#allocation8 + $0x20] sm:$0xf]
    %v1072 = vld [vmem:[#allocation8 + $0x24] sm:$0xf]
    %v1073 = vld [vmem:[#allocation8 + $0x28] sm:$0xf]
    %v1074 = vld [vmem:[#allocation8 + $0x2c] sm:$0xf]
    %v1075 = vld [vmem:[#allocation8 + $0x30] sm:$0xf]
    %v1076 = vld [vmem:[#allocation8 + $0x34] sm:$0xf]
    %v1077 = vld [vmem:[#allocation8 + $0x38] sm:$0xf]
    %v1078 = vld [vmem:[#allocation8 + $0x3c] sm:$0xf]
    %v1079 = vld [vmem:[%s10] sm:$0x1]
    %v1081 = vlaneseq
    %v1082 = vshrl.u32 %v1081, 7
    %v1083 = vsub.s32 0, %v1082
    %v1084 = vrot.slane %v1079, %v1083
    %v1102 = vunpack.c.l.b16 %v1063
    %v1103 = vunpack.c.l.b16 %v1064
    %v1104 = vunpack.c.l.b16 %v1065
    %v1105 = vunpack.c.l.b16 %v1066
    %v1106 = vunpack.c.l.b16 %v1067
    %v1107 = vunpack.c.l.b16 %v1068
    %v1108 = vunpack.c.l.b16 %v1069
    %v1109 = vunpack.c.l.b16 %v1070
    %v1110 = vunpack.c.l.b16 %v1071
    %v1111 = vunpack.c.l.b16 %v1072
    %v1112 = vunpack.c.l.b16 %v1073
    %v1113 = vunpack.c.l.b16 %v1074
    %v1114 = vunpack.c.l.b16 %v1075
    %v1115 = vunpack.c.l.b16 %v1076
    %v1116 = vunpack.c.l.b16 %v1077
    %v1117 = vunpack.c.l.b16 %v1078
    %v1118 = vpack.c.b16 %v1103, %v1102
    %v1119 = vpack.c.b16 %v1105, %v1104
    %v1120 = vpack.c.b16 %v1107, %v1106
    %v1121 = vpack.c.b16 %v1109, %v1108
    %v1122 = vpack.c.b16 %v1111, %v1110
    %v1123 = vpack.c.b16 %v1113, %v1112
    %v1124 = vpack.c.b16 %v1115, %v1114
    %v1125 = vpack.c.b16 %v1117, %v1116
    %1134 = vmatprep.subr.bf16.mxu0 0
    %1135 = vmatpush1.bf16.msra.mxu0 %v1118
    %1136 = vmatprep.subr.bf16.mxu0 0
    %1137 = vmatpush1.bf16.msra.mxu0 %v1119
    %1138 = vmatprep.subr.bf16.mxu0 0
    %1139 = vmatpush1.bf16.msra.mxu0 %v1120
    %1140 = vmatprep.subr.bf16.mxu0 0
    %1141 = vmatpush1.bf16.msra.mxu0 %v1121
    %1142 = vmatprep.subr.bf16.mxu0 0
    %1143 = vmatpush1.bf16.msra.mxu0 %v1122
    %1144 = vmatprep.subr.bf16.mxu0 0
    %1145 = vmatpush1.bf16.msra.mxu0 %v1123
    %1146 = vmatprep.subr.bf16.mxu0 0
    %1147 = vmatpush1.bf16.msra.mxu0 %v1124
    %1148 = vmatprep.subr.bf16.mxu0 0
    %1149 = vmatpush1.bf16.msra.mxu0 %v1125
    %1150 = vmatprep.subr.bf16.mxu0 0
    %1151 = vmatpush1.bf16.msra.mxu0 0
    %1152 = vmatprep.subr.bf16.mxu0 0
    %1153 = vmatpush1.bf16.msra.mxu0 0
    %1154 = vmatprep.subr.bf16.mxu0 0
    %1155 = vmatpush1.bf16.msra.mxu0 0
    %1156 = vmatprep.subr.bf16.mxu0 0
    %1157 = vmatpush1.bf16.msra.mxu0 0
    %1158 = vmatprep.subr.bf16.mxu0 0
    %1159 = vmatpush1.bf16.msra.mxu0 0
    %1160 = vmatprep.subr.bf16.mxu0 0
    %1161 = vmatpush1.bf16.msra.mxu0 0
    %1162 = vmatprep.subr.bf16.mxu0 0
    %1163 = vmatpush1.bf16.msra.mxu0 0
    %1164 = vmatprep.subr.bf16.mxu0 0
    %1165 = vmatpush1.bf16.msra.mxu0 0
    %1166 = vmatprep.mubr.bf16.mxu0 0
    %1167 = vmatmul.mubr.bf16.gmra.mrb[0].mxu0 %v1055
    %v1168 = vpop.f32.mrb[0].mxu0
    %v1169 = vadd.f32 %v1084, %v1168
    %v1170 = vpop.f32.mrb[0].mxu0
    %v1171 = vpop.f32.mrb[0].mxu0
    %v1172 = vadd.f32 %v1084, %v1171
    %v1173 = vpop.f32.mrb[0].mxu0
    %1174 = vmatprep.mubr.bf16.mxu0 0
    %1175 = vmatmul.mubr.bf16.gmra.mrb[0].mxu0 %v1056
    %v1176 = vpop.f32.mrb[0].mxu0
    %v1177 = vadd.f32 %v1084, %v1176
    %v1178 = vpop.f32.mrb[0].mxu0
    %v1179 = vpop.f32.mrb[0].mxu0
    %v1180 = vadd.f32 %v1084, %v1179
    %v1181 = vpop.f32.mrb[0].mxu0
    %1182 = vmatprep.mubr.bf16.mxu0 0
    %1183 = vmatmul.mubr.bf16.gmra.mrb[0].mxu0 %v1057
    %v1184 = vpop.f32.mrb[0].mxu0
    %v1185 = vadd.f32 %v1084, %v1184
    %v1186 = vpop.f32.mrb[0].mxu0
    %v1187 = vpop.f32.mrb[0].mxu0
    %v1188 = vadd.f32 %v1084, %v1187
    %v1189 = vpop.f32.mrb[0].mxu0
    %1190 = vmatprep.mubr.bf16.mxu0 0
    %1191 = vmatmul.mubr.bf16.gmra.mrb[0].mxu0 %v1058
    %v1192 = vpop.f32.mrb[0].mxu0
    %v1193 = vadd.f32 %v1084, %v1192
    %v1194 = vpop.f32.mrb[0].mxu0
    %v1195 = vpop.f32.mrb[0].mxu0
    %v1196 = vadd.f32 %v1084, %v1195
    %v1197 = vpop.f32.mrb[0].mxu0
    %1198 = vmatprep.mubr.bf16.mxu0 0
    %1199 = vmatmul.mubr.bf16.gmra.mrb[0].mxu0 %v1059
    %v1200 = vpop.f32.mrb[0].mxu0
    %v1201 = vadd.f32 %v1084, %v1200
    %v1202 = vpop.f32.mrb[0].mxu0
    %v1203 = vpop.f32.mrb[0].mxu0
    %v1204 = vadd.f32 %v1084, %v1203
    %v1205 = vpop.f32.mrb[0].mxu0
    %1206 = vmatprep.mubr.bf16.mxu0 0
    %1207 = vmatmul.mubr.bf16.gmra.mrb[0].mxu0 %v1060
    %v1208 = vpop.f32.mrb[0].mxu0
    %v1209 = vadd.f32 %v1084, %v1208
    %v1210 = vpop.f32.mrb[0].mxu0
    %v1211 = vpop.f32.mrb[0].mxu0
    %v1212 = vadd.f32 %v1084, %v1211
    %v1213 = vpop.f32.mrb[0].mxu0
    %1214 = vmatprep.mubr.bf16.mxu0 0
    %1215 = vmatmul.mubr.bf16.gmra.mrb[0].mxu0 %v1061
    %v1216 = vpop.f32.mrb[0].mxu0
    %v1217 = vadd.f32 %v1084, %v1216
    %v1218 = vpop.f32.mrb[0].mxu0
    %v1219 = vpop.f32.mrb[0].mxu0
    %v1220 = vadd.f32 %v1084, %v1219
    %v1221 = vpop.f32.mrb[0].mxu0
    %1222 = vmatprep.mubr.bf16.mxu0 0
    %1223 = vmatmul.mubr.bf16.gmra.mrb[0].mxu0 %v1062
    %v1224 = vpop.f32.mrb[0].mxu0
    %v1225 = vadd.f32 %v1084, %v1224
    %v1226 = vpop.f32.mrb[0].mxu0
    %v1227 = vpop.f32.mrb[0].mxu0
    %v1228 = vadd.f32 %v1084, %v1227
    %v1229 = vpop.f32.mrb[0].mxu0
    %1230 = vdwg.mxu0
    %v1231 = vpack.c.bf16 %v1172, %v1169
    %v1232 = vpack.c.bf16 %v1180, %v1177
    %v1233 = vpack.c.bf16 %v1188, %v1185
    %v1234 = vpack.c.bf16 %v1196, %v1193
    %v1235 = vpack.c.bf16 %v1204, %v1201
    %v1236 = vpack.c.bf16 %v1212, %v1209
    %v1237 = vpack.c.bf16 %v1220, %v1217
    %v1238 = vpack.c.bf16 %v1228, %v1225
    %v1239 = vmul.bf16 %v1231, %v1231
    %v1240 = vmul.bf16 %v1232, %v1232
    %v1241 = vmul.bf16 %v1233, %v1233
    %v1242 = vmul.bf16 %v1234, %v1234
    %v1243 = vmul.bf16 %v1235, %v1235
    %v1244 = vmul.bf16 %v1236, %v1236
    %v1245 = vmul.bf16 %v1237, %v1237
    %v1246 = vmul.bf16 %v1238, %v1238
    %v1247 = vmul.bf16 %v1239, %v1231
    %v1248 = vmul.bf16 %v1240, %v1232
    %v1249 = vmul.bf16 %v1241, %v1233
    %v1250 = vmul.bf16 %v1242, %v1234
    %v1251 = vmul.bf16 %v1243, %v1235
    %v1252 = vmul.bf16 %v1244, %v1236
    %v1253 = vmul.bf16 %v1245, %v1237
    %v1254 = vmul.bf16 %v1246, %v1238
    %v1255 = vmul.bf16 %v1247, 1027030327
    %v1256 = vmul.bf16 %v1248, 1027030327
    %v1257 = vmul.bf16 %v1249, 1027030327
    %v1258 = vmul.bf16 %v1250, 1027030327
    %v1259 = vmul.bf16 %v1251, 1027030327
    %v1260 = vmul.bf16 %v1252, 1027030327
    %v1261 = vmul.bf16 %v1253, 1027030327
    %v1262 = vmul.bf16 %v1254, 1027030327
    %v1263 = vadd.bf16 %v1231, %v1255
    %v1264 = vadd.bf16 %v1232, %v1256
    %v1265 = vadd.bf16 %v1233, %v1257
    %v1266 = vadd.bf16 %v1234, %v1258
    %v1267 = vadd.bf16 %v1235, %v1259
    %v1268 = vadd.bf16 %v1236, %v1260
    %v1269 = vadd.bf16 %v1237, %v1261
    %v1270 = vadd.bf16 %v1238, %v1262
    %v1271 = vmul.bf16 %v1263, 1061961548
    %v1272 = vmul.bf16 %v1264, 1061961548
    %v1273 = vmul.bf16 %v1265, 1061961548
    %v1274 = vmul.bf16 %v1266, 1061961548
    %v1275 = vmul.bf16 %v1267, 1061961548
    %v1276 = vmul.bf16 %v1268, 1061961548
    %v1277 = vmul.bf16 %v1269, 1061961548
    %v1278 = vmul.bf16 %v1270, 1061961548
    %v1279 = vmul.bf16 %v1231, 1056980736
    %v1280 = vmul.bf16 %v1232, 1056980736
    %v1281 = vmul.bf16 %v1233, 1056980736
    %v1282 = vmul.bf16 %v1234, 1056980736
    %v1283 = vmul.bf16 %v1235, 1056980736
    %v1284 = vmul.bf16 %v1236, 1056980736
    %v1285 = vmul.bf16 %v1237, 1056980736
    %v1286 = vmul.bf16 %v1238, 1056980736
    %v1287 = vtanh.bf16.pop %v1271
    %v1288 = vtanh.bf16.pop %v1272
    %v1289 = vtanh.bf16.pop %v1273
    %v1290 = vtanh.bf16.pop %v1274
    %v1291 = vtanh.bf16.pop %v1275
    %v1292 = vtanh.bf16.pop %v1276
    %v1293 = vtanh.bf16.pop %v1277
    %v1294 = vtanh.bf16.pop %v1278
    %v1295 = vadd.bf16 %v1287, 1065369472
    %v1296 = vadd.bf16 %v1288, 1065369472
    %v1297 = vadd.bf16 %v1289, 1065369472
    %v1298 = vadd.bf16 %v1290, 1065369472
    %v1299 = vadd.bf16 %v1291, 1065369472
    %v1300 = vadd.bf16 %v1292, 1065369472
    %v1301 = vadd.bf16 %v1293, 1065369472
    %v1302 = vadd.bf16 %v1294, 1065369472
    %v1303 = vmul.bf16 %v1279, %v1295
    %v1304 = vmul.bf16 %v1280, %v1296
    %v1305 = vmul.bf16 %v1281, %v1297
    %v1306 = vmul.bf16 %v1282, %v1298
    %v1307 = vmul.bf16 %v1283, %v1299
    %v1308 = vmul.bf16 %v1284, %v1300
    %v1309 = vmul.bf16 %v1285, %v1301
    %v1310 = vmul.bf16 %v1286, %v1302
    %v1311 = vld [vmem:[#allocation10] sm:$0xf]
    %v1312 = vld [vmem:[#allocation10 + $0x4] sm:$0xf]
    %v1313 = vld [vmem:[#allocation10 + $0x8] sm:$0xf]
    %v1314 = vld [vmem:[#allocation10 + $0xc] sm:$0xf]
    %v1315 = vld [vmem:[#allocation10 + $0x10] sm:$0xf]
    %v1316 = vld [vmem:[#allocation10 + $0x14] sm:$0xf]
    %v1317 = vld [vmem:[#allocation10 + $0x18] sm:$0xf]
    %v1318 = vld [vmem:[#allocation10 + $0x1c] sm:$0xf]
    %v1319 = vld [vmem:[#allocation10 + $0x20] sm:$0xf]
    %v1320 = vld [vmem:[#allocation10 + $0x24] sm:$0xf]
    %v1321 = vld [vmem:[#allocation10 + $0x28] sm:$0xf]
    %v1322 = vld [vmem:[#allocation10 + $0x2c] sm:$0xf]
    %v1323 = vld [vmem:[#allocation10 + $0x30] sm:$0xf]
    %v1324 = vld [vmem:[#allocation10 + $0x34] sm:$0xf]
    %v1325 = vld [vmem:[#allocation10 + $0x38] sm:$0xf]
    %v1326 = vld [vmem:[#allocation10 + $0x3c] sm:$0xf]
    %v1327 = vld [vmem:[%s12] sm:$0x1]
    %v1329 = vlaneseq
    %v1330 = vshrl.u32 %v1329, 7
    %v1331 = vsub.s32 0, %v1330
    %v1332 = vrot.slane %v1327, %v1331
    %v1350 = vunpack.c.l.b16 %v1311
    %v1351 = vunpack.c.l.b16 %v1312
    %v1352 = vunpack.c.l.b16 %v1313
    %v1353 = vunpack.c.l.b16 %v1314
    %v1354 = vunpack.c.l.b16 %v1315
    %v1355 = vunpack.c.l.b16 %v1316
    %v1356 = vunpack.c.l.b16 %v1317
    %v1357 = vunpack.c.l.b16 %v1318
    %v1358 = vunpack.c.l.b16 %v1319
    %v1359 = vunpack.c.l.b16 %v1320
    %v1360 = vunpack.c.l.b16 %v1321
    %v1361 = vunpack.c.l.b16 %v1322
    %v1362 = vunpack.c.l.b16 %v1323
    %v1363 = vunpack.c.l.b16 %v1324
    %v1364 = vunpack.c.l.b16 %v1325
    %v1365 = vunpack.c.l.b16 %v1326
    %v1366 = vpack.c.b16 %v1351, %v1350
    %v1367 = vpack.c.b16 %v1353, %v1352
    %v1368 = vpack.c.b16 %v1355, %v1354
    %v1369 = vpack.c.b16 %v1357, %v1356
    %v1370 = vpack.c.b16 %v1359, %v1358
    %v1371 = vpack.c.b16 %v1361, %v1360
    %v1372 = vpack.c.b16 %v1363, %v1362
    %v1373 = vpack.c.b16 %v1365, %v1364
    %1382 = vmatprep.subr.bf16.mxu0 0
    %1383 = vmatpush1.bf16.msra.mxu0 %v1366
    %1384 = vmatprep.subr.bf16.mxu0 0
    %1385 = vmatpush1.bf16.msra.mxu0 %v1367
    %1386 = vmatprep.subr.bf16.mxu0 0
    %1387 = vmatpush1.bf16.msra.mxu0 %v1368
    %1388 = vmatprep.subr.bf16.mxu0 0
    %1389 = vmatpush1.bf16.msra.mxu0 %v1369
    %1390 = vmatprep.subr.bf16.mxu0 0
    %1391 = vmatpush1.bf16.msra.mxu0 %v1370
    %1392 = vmatprep.subr.bf16.mxu0 0
    %1393 = vmatpush1.bf16.msra.mxu0 %v1371
    %1394 = vmatprep.subr.bf16.mxu0 0
    %1395 = vmatpush1.bf16.msra.mxu0 %v1372
    %1396 = vmatprep.subr.bf16.mxu0 0
    %1397 = vmatpush1.bf16.msra.mxu0 %v1373
    %1398 = vmatprep.subr.bf16.mxu0 0
    %1399 = vmatpush1.bf16.msra.mxu0 0
    %1400 = vmatprep.subr.bf16.mxu0 0
    %1401 = vmatpush1.bf16.msra.mxu0 0
    %1402 = vmatprep.subr.bf16.mxu0 0
    %1403 = vmatpush1.bf16.msra.mxu0 0
    %1404 = vmatprep.subr.bf16.mxu0 0
    %1405 = vmatpush1.bf16.msra.mxu0 0
    %1406 = vmatprep.subr.bf16.mxu0 0
    %1407 = vmatpush1.bf16.msra.mxu0 0
    %1408 = vmatprep.subr.bf16.mxu0 0
    %1409 = vmatpush1.bf16.msra.mxu0 0
    %1410 = vmatprep.subr.bf16.mxu0 0
    %1411 = vmatpush1.bf16.msra.mxu0 0
    %1412 = vmatprep.subr.bf16.mxu0 0
    %1413 = vmatpush1.bf16.msra.mxu0 0
    %1414 = vmatprep.mubr.bf16.mxu0 0
    %1415 = vmatmul.mubr.bf16.gmra.mrb[0].mxu0 %v1303
    %v1416 = vpop.f32.mrb[0].mxu0
    %v1417 = vadd.f32 %v1332, %v1416
    %v1418 = vpop.f32.mrb[0].mxu0
    %v1419 = vpop.f32.mrb[0].mxu0
    %v1420 = vadd.f32 %v1332, %v1419
    %v1421 = vpop.f32.mrb[0].mxu0
    %1422 = vmatprep.mubr.bf16.mxu0 0
    %1423 = vmatmul.mubr.bf16.gmra.mrb[0].mxu0 %v1304
    %v1424 = vpop.f32.mrb[0].mxu0
    %v1425 = vadd.f32 %v1332, %v1424
    %v1426 = vpop.f32.mrb[0].mxu0
    %v1427 = vpop.f32.mrb[0].mxu0
    %v1428 = vadd.f32 %v1332, %v1427
    %v1429 = vpop.f32.mrb[0].mxu0
    %1430 = vmatprep.mubr.bf16.mxu0 0
    %1431 = vmatmul.mubr.bf16.gmra.mrb[0].mxu0 %v1305
    %v1432 = vpop.f32.mrb[0].mxu0
    %v1433 = vadd.f32 %v1332, %v1432
    %v1434 = vpop.f32.mrb[0].mxu0
    %v1435 = vpop.f32.mrb[0].mxu0
    %v1436 = vadd.f32 %v1332, %v1435
    %v1437 = vpop.f32.mrb[0].mxu0
    %1438 = vmatprep.mubr.bf16.mxu0 0
    %1439 = vmatmul.mubr.bf16.gmra.mrb[0].mxu0 %v1306
    %v1440 = vpop.f32.mrb[0].mxu0
    %v1441 = vadd.f32 %v1332, %v1440
    %v1442 = vpop.f32.mrb[0].mxu0
    %v1443 = vpop.f32.mrb[0].mxu0
    %v1444 = vadd.f32 %v1332, %v1443
    %v1445 = vpop.f32.mrb[0].mxu0
    %1446 = vmatprep.mubr.bf16.mxu0 0
    %1447 = vmatmul.mubr.bf16.gmra.mrb[0].mxu0 %v1307
    %v1448 = vpop.f32.mrb[0].mxu0
    %v1449 = vadd.f32 %v1332, %v1448
    %v1450 = vpop.f32.mrb[0].mxu0
    %v1451 = vpop.f32.mrb[0].mxu0
    %v1452 = vadd.f32 %v1332, %v1451
    %v1453 = vpop.f32.mrb[0].mxu0
    %1454 = vmatprep.mubr.bf16.mxu0 0
    %1455 = vmatmul.mubr.bf16.gmra.mrb[0].mxu0 %v1308
    %v1456 = vpop.f32.mrb[0].mxu0
    %v1457 = vadd.f32 %v1332, %v1456
    %v1458 = vpop.f32.mrb[0].mxu0
    %v1459 = vpop.f32.mrb[0].mxu0
    %v1460 = vadd.f32 %v1332, %v1459
    %v1461 = vpop.f32.mrb[0].mxu0
    %1462 = vmatprep.mubr.bf16.mxu0 0
    %1463 = vmatmul.mubr.bf16.gmra.mrb[0].mxu0 %v1309
    %v1464 = vpop.f32.mrb[0].mxu0
    %v1465 = vadd.f32 %v1332, %v1464
    %v1466 = vpop.f32.mrb[0].mxu0
    %v1467 = vpop.f32.mrb[0].mxu0
    %v1468 = vadd.f32 %v1332, %v1467
    %v1469 = vpop.f32.mrb[0].mxu0
    %1470 = vmatprep.mubr.bf16.mxu0 0
    %1471 = vmatmul.mubr.bf16.gmra.mrb[0].mxu0 %v1310
    %v1472 = vpop.f32.mrb[0].mxu0
    %v1473 = vadd.f32 %v1332, %v1472
    %v1474 = vpop.f32.mrb[0].mxu0
    %v1475 = vpop.f32.mrb[0].mxu0
    %v1476 = vadd.f32 %v1332, %v1475
    %v1477 = vpop.f32.mrb[0].mxu0
    %1478 = vdwg.mxu0
    %v1479 = vadd.f32 %v801, %v1417
    %v1480 = vadd.f32 %v802, %v1420
    %v1481 = vadd.f32 %v803, %v1425
    %v1482 = vadd.f32 %v804, %v1428
    %v1483 = vadd.f32 %v805, %v1433
    %v1484 = vadd.f32 %v806, %v1436
    %v1485 = vadd.f32 %v807, %v1441
    %v1486 = vadd.f32 %v808, %v1444
    %v1487 = vadd.f32 %v809, %v1449
    %v1488 = vadd.f32 %v810, %v1452
    %v1489 = vadd.f32 %v811, %v1457
    %v1490 = vadd.f32 %v812, %v1460
    %v1491 = vadd.f32 %v813, %v1465
    %v1492 = vadd.f32 %v814, %v1468
    %v1493 = vadd.f32 %v815, %v1473
    %v1494 = vadd.f32 %v816, %v1476
    %1495 = vst [vmem:[#allocation11] sm:$0xff] %v1479
    %1496 = vst [vmem:[#allocation11 + $0x8] sm:$0xff] %v1480
    %1497 = vst [vmem:[#allocation11 + $0x10] sm:$0xff] %v1481
    %1498 = vst [vmem:[#allocation11 + $0x18] sm:$0xff] %v1482
    %1499 = vst [vmem:[#allocation11 + $0x20] sm:$0xff] %v1483
    %1500 = vst [vmem:[#allocation11 + $0x28] sm:$0xff] %v1484
    %1501 = vst [vmem:[#allocation11 + $0x30] sm:$0xff] %v1485
    %1502 = vst [vmem:[#allocation11 + $0x38] sm:$0xff] %v1486
    %1503 = vst [vmem:[#allocation11 + $0x40] sm:$0xff] %v1487
    %1504 = vst [vmem:[#allocation11 + $0x48] sm:$0xff] %v1488
    %1505 = vst [vmem:[#allocation11 + $0x50] sm:$0xff] %v1489
    %1506 = vst [vmem:[#allocation11 + $0x58] sm:$0xff] %v1490
    %1507 = vst [vmem:[#allocation11 + $0x60] sm:$0xff] %v1491
    %1508 = vst [vmem:[#allocation11 + $0x68] sm:$0xff] %v1492
    %1509 = vst [vmem:[#allocation11 + $0x70] sm:$0xff] %v1493
    %1510 = vst [vmem:[#allocation11 + $0x78] sm:$0xff] %v1494
    // Predicated region
    $region74: #{tpu_custom_call.1} parent=1 // pred_check
      _
    $region75: #{tpu_custom_call.1} parent=1 // pred_check_branch
      %1512 = sbr.rel (0) target = $region77
    $region76: #{tpu_custom_call.1} parent=1 // pred_region
      %s1514 = ssub.s32 2048, 2048
      %1515 = vsyncadd [#allocation4], %s1514
      %s1516 = sshll.u32 [#allocation11], 4
      %s1517 = int_to_ptr.vmem [resolvable:$true] %s1516
      %1522 = dma.vmem_to_hbm [thread:$0]  %s1517, 2048, %s13, [#allocation4], 128, 128, 8
    $region77: #{tpu_custom_call.1} parent=1 // pred_fallthru
      _
    // Predicated region
    $region78: #{tpu_custom_call.1} parent=1 // pred_check
      _
    $region79: #{tpu_custom_call.1} parent=1 // pred_check_branch
      %1524 = sbr.rel (0) target = $region81
    $region80: #{tpu_custom_call.1} parent=1 // pred_region
      %1525 = dma.done [#allocation4], 2048
    $region81: #{tpu_custom_call.1} parent=1 // pred_fallthru
      _
    %1526 = vsyncpa [#allocation3], 1
    %1527 = vsyncpa [#allocation6], 1
    %1528 = vsyncpa [#allocation9], 1
    %1529 = vsyncpa [#allocation4], 1

</llo_original>
